<compile_context>
chip_gen: v7x
topology: tpu7x:2x2x1
jax: 0.10.0
libtpu: 0.0.40
codegen_flags: <defaults>
</compile_context>

<pallas_src>
import functools

import jax
import jax.numpy as jnp
from jax.experimental import pallas as pl
from jax.experimental.pallas import tpu as pltpu


def _round_up(x, m):
    return (x + m - 1) // m * m


# ---------------------------------------------------------------------------
# Pallas kernels (factories closing over static dims)
# ---------------------------------------------------------------------------

def make_encoder_kernel(n_layers, h_pad):
    """Whole encoder sequence. grid=(src_len,). h/c live in the resident outputs."""

    def kernel(emb_ref, w_ref, b_ref, h_ref, c_ref):
        t = pl.program_id(0)

        @pl.when(t == 0)
        def _init():
            h_ref[...] = jnp.zeros_like(h_ref)
            c_ref[...] = jnp.zeros_like(c_ref)

        x = emb_ref[0]                                 # [B_pad, E_pad]
        for layer in range(n_layers):                  # static unroll over layers
            h = h_ref[layer]
            c = c_ref[layer]
            xh = jnp.concatenate([x, h], axis=1)       # [B_pad, E_pad + H_pad]
            gates = (jnp.dot(xh, w_ref[layer], preferred_element_type=jnp.float32)
                     + b_ref[layer])                   # [B_pad, 4*H_pad]
            # lane-aligned 128-wide gate blocks
            i_g = jax.nn.sigmoid(gates[:, 0 * h_pad:1 * h_pad])
            f_g = jax.nn.sigmoid(gates[:, 1 * h_pad:2 * h_pad])
            g_g = jnp.tanh(gates[:, 2 * h_pad:3 * h_pad])
            o_g = jax.nn.sigmoid(gates[:, 3 * h_pad:4 * h_pad])
            c_new = f_g * c + i_g * g_g
            h_new = o_g * jnp.tanh(c_new)
            h_ref[layer] = h_new
            c_ref[layer] = c_new
            x = h_new

    return kernel


def make_decoder_kernel(n_layers, b_pad, h_pad, v_pad, v_valid):
    """Whole decoder loop. grid=(trg_len-1,). Fuses embedding gather, stacked LSTM,
    vocab projection, argmax and teacher-forcing token select."""

    def kernel(tf_ref,                                  # scalar prefetch (SMEM) [T-1] int32
               trg0_ref, trg_next_ref, emb_ref, w_ref, b_ref,
               fcw_ref, fcb_ref, h0_ref, c0_ref,
               out_ref,
               h_sc, c_sc, tok_sc):
        g = pl.program_id(0)

        @pl.when(g == 0)
        def _init():
            h_sc[...] = h0_ref[...]
            c_sc[...] = c0_ref[...]
            tok_sc[...] = trg0_ref[...]

        # Data-dependent embedding gather via one-hot matmul (MXU, table stays in VMEM).
        tok = tok_sc[...]                                                # (B_pad, 1) int32
        col_v = jax.lax.broadcasted_iota(jnp.int32, (b_pad, v_pad), 1)   # (B_pad, V_pad)
        one_hot = (col_v == tok).astype(jnp.float32)
        x = jnp.dot(one_hot, emb_ref[...], preferred_element_type=jnp.float32)  # (B_pad, E_pad)

        for layer in range(n_layers):
            h = h_sc[layer]
            c = c_sc[layer]
            xh = jnp.concatenate([x, h], axis=1)
            gates = (jnp.dot(xh, w_ref[layer], preferred_element_type=jnp.float32)
                     + b_ref[layer])
            i_g = jax.nn.sigmoid(gates[:, 0 * h_pad:1 * h_pad])
            f_g = jax.nn.sigmoid(gates[:, 1 * h_pad:2 * h_pad])
            g_g = jnp.tanh(gates[:, 2 * h_pad:3 * h_pad])
            o_g = jax.nn.sigmoid(gates[:, 3 * h_pad:4 * h_pad])
            c_new = f_g * c + i_g * g_g
            h_new = o_g * jnp.tanh(c_new)
            h_sc[layer] = h_new
            c_sc[layer] = c_new
            x = h_new

        # Vocab projection -> lane-dense padded output block.
        logits = (jnp.dot(x, fcw_ref[...], preferred_element_type=jnp.float32)
                  + fcb_ref[...])                                        # (B_pad, V_pad)
        out_ref[0] = logits

        # argmax over valid vocab columns (first index of the max, like torch.max).
        masked = jnp.where(col_v < v_valid, logits, -jnp.inf)
        m = jnp.max(masked, axis=1, keepdims=True)
        idxf = jnp.where(masked == m, col_v.astype(jnp.float32), jnp.float32(v_pad))
        top1 = jnp.min(idxf, axis=1, keepdims=True).astype(jnp.int32)    # (B_pad, 1)

        # Teacher forcing: dec_input_{t+1} = tf ? trg[t] : top1
        tf = tf_ref[g]                                                   # 0/1 int32 scalar
        trg_t = trg_next_ref[0]                                          # (B_pad, 1) int32
        tok_sc[...] = tf * trg_t + (1 - tf) * top1

    return kernel


# ---------------------------------------------------------------------------
# pallas_call wrappers
# ---------------------------------------------------------------------------

def run_encoder(emb_pad, enc_w, enc_b, *, n_layers, b_pad, h_pad, e_pad):
    src_len = emb_pad.shape[0]
    kernel = make_encoder_kernel(n_layers, h_pad)
    return pl.pallas_call(
        kernel,
        out_shape=(jax.ShapeDtypeStruct((n_layers, b_pad, h_pad), jnp.float32),
                   jax.ShapeDtypeStruct((n_layers, b_pad, h_pad), jnp.float32)),
        grid_spec=pltpu.PrefetchScalarGridSpec(
            num_scalar_prefetch=0,
            grid=(src_len,),
            in_specs=[
                pl.BlockSpec((1, b_pad, e_pad), lambda t: (t, 0, 0)),
                pl.BlockSpec((n_layers, e_pad + h_pad, 4 * h_pad), lambda t: (0, 0, 0)),
                pl.BlockSpec((n_layers, 1, 4 * h_pad), lambda t: (0, 0, 0)),
            ],
            out_specs=(
                pl.BlockSpec((n_layers, b_pad, h_pad), lambda t: (0, 0, 0)),
                pl.BlockSpec((n_layers, b_pad, h_pad), lambda t: (0, 0, 0)),
            ),
        ),
        compiler_params=pltpu.CompilerParams(dimension_semantics=("arbitrary",)),
    )(emb_pad, enc_w, enc_b)


def run_decoder(tf_flags, trg0, trg_next, dec_emb, dec_w, dec_b, fc_w, fc_b,
                h0, c0, *, n_layers, b_pad, h_pad, e_pad, v_pad, v_valid):
    steps = trg_next.shape[0]
    kernel = make_decoder_kernel(n_layers, b_pad, h_pad, v_pad, v_valid)
    return pl.pallas_call(
        kernel,
        out_shape=jax.ShapeDtypeStruct((steps, b_pad, v_pad), jnp.float32),
        grid_spec=pltpu.PrefetchScalarGridSpec(
            num_scalar_prefetch=1,
            grid=(steps,),
            in_specs=[
                pl.BlockSpec((b_pad, 1), lambda g, tf: (0, 0)),                       # trg[0]
                pl.BlockSpec((1, b_pad, 1), lambda g, tf: (g, 0, 0)),                 # trg[t]
                pl.BlockSpec((v_pad, e_pad), lambda g, tf: (0, 0)),                   # dec emb
                pl.BlockSpec((n_layers, e_pad + h_pad, 4 * h_pad), lambda g, tf: (0, 0, 0)),
                pl.BlockSpec((n_layers, 1, 4 * h_pad), lambda g, tf: (0, 0, 0)),
                pl.BlockSpec((h_pad, v_pad), lambda g, tf: (0, 0)),                   # fc_w
                pl.BlockSpec((1, v_pad), lambda g, tf: (0, 0)),                       # fc_b
                pl.BlockSpec((n_layers, b_pad, h_pad), lambda g, tf: (0, 0, 0)),      # h0
                pl.BlockSpec((n_layers, b_pad, h_pad), lambda g, tf: (0, 0, 0)),      # c0
            ],
            out_specs=pl.BlockSpec((1, b_pad, v_pad), lambda g, tf: (g, 0, 0)),
            scratch_shapes=[
                pltpu.VMEM((n_layers, b_pad, h_pad), jnp.float32),   # h state
                pltpu.VMEM((n_layers, b_pad, h_pad), jnp.float32),   # c state
                pltpu.VMEM((b_pad, 1), jnp.int32),                   # current dec token
            ],
        ),
        compiler_params=pltpu.CompilerParams(dimension_semantics=("arbitrary",)),
    )(tf_flags, trg0, trg_next, dec_emb, dec_w, dec_b, fc_w, fc_b, h0, c0)


# ---------------------------------------------------------------------------
# Parameters (logical) + padded/fused kernel layout
# ---------------------------------------------------------------------------

def make_params(key, *, input_dim, output_dim, emb_dim, hid_dim, n_layers):
    keys = jax.random.split(key, 4 + 6 * n_layers)
    k = iter(keys)

    def rnd(shape, kk, scale=0.1):
        return (scale * jax.random.normal(kk, shape)).astype(jnp.float32)

    params = {
        "enc_emb": rnd((input_dim, emb_dim), next(k)),
        "dec_emb": rnd((output_dim, emb_dim), next(k)),
        "fc_w": rnd((hid_dim, output_dim), next(k)),
        "fc_b": rnd((1, output_dim), next(k)),
        "enc_lstm": [],
        "dec_lstm": [],
    }
    for layer in range(n_layers):
        in_dim = emb_dim if layer == 0 else hid_dim
        for which in ("enc_lstm", "dec_lstm"):
            params[which].append({
                "w_ih": rnd((in_dim, 4 * hid_dim), next(k)),
                "w_hh": rnd((hid_dim, 4 * hid_dim), next(k)),
                "b": rnd((1, 4 * hid_dim), next(k)),
            })
    return params


def pad_params(params, *, input_dim, output_dim, emb_dim, hid_dim, n_layers,
               e_pad, h_pad, v_pad):
    """Re-lay parameters into padded, fused-K, lane-aligned-gate form."""

    def pad_lstm_stack(layers):
        ws, bs = [], []
        for layer, lp in enumerate(layers):
            in_dim = emb_dim if layer == 0 else hid_dim
            w = jnp.zeros((e_pad + h_pad, 4 * h_pad), jnp.float32)
            b = jnp.zeros((1, 4 * h_pad), jnp.float32)
            for gk in range(4):
                w = w.at[:in_dim, gk * h_pad:gk * h_pad + hid_dim].set(
                    lp["w_ih"][:, gk * hid_dim:(gk + 1) * hid_dim])
                w = w.at[e_pad:e_pad + hid_dim, gk * h_pad:gk * h_pad + hid_dim].set(
                    lp["w_hh"][:, gk * hid_dim:(gk + 1) * hid_dim])
                b = b.at[:, gk * h_pad:gk * h_pad + hid_dim].set(
                    lp["b"][:, gk * hid_dim:(gk + 1) * hid_dim])
            ws.append(w)
            bs.append(b)
        return jnp.stack(ws), jnp.stack(bs)

    enc_w, enc_b = pad_lstm_stack(params["enc_lstm"])
    dec_w, dec_b = pad_lstm_stack(params["dec_lstm"])
    enc_emb = jnp.zeros((input_dim, e_pad), jnp.float32).at[:, :emb_dim].set(params["enc_emb"])
    dec_emb = jnp.zeros((v_pad, e_pad), jnp.float32).at[:output_dim, :emb_dim].set(params["dec_emb"])
    fc_w = jnp.zeros((h_pad, v_pad), jnp.float32).at[:hid_dim, :output_dim].set(params["fc_w"])
    fc_b = jnp.zeros((1, v_pad), jnp.float32).at[:, :output_dim].set(params["fc_b"])
    return {"enc_w": enc_w, "enc_b": enc_b, "dec_w": dec_w, "dec_b": dec_b,
            "enc_emb": enc_emb, "dec_emb": dec_emb, "fc_w": fc_w, "fc_b": fc_b}


# ---------------------------------------------------------------------------
# Jitted forward
# ---------------------------------------------------------------------------

def build_forward(*, n_layers, output_dim, batch, b_pad, e_pad, h_pad, v_pad):
    @jax.jit
    def forward(src, trg, pp, tf_flags):
        # --- encoder (embedding gather with statically-known tokens done in XLA) ---
        emb = jnp.take(pp["enc_emb"], src, axis=0)                      # [S, B, E_pad]
        emb = jnp.pad(emb, ((0, 0), (0, b_pad - batch), (0, 0)))        # [S, B_pad, E_pad]
        h0, c0 = run_encoder(emb, pp["enc_w"], pp["enc_b"],
                             n_layers=n_layers, b_pad=b_pad, h_pad=h_pad, e_pad=e_pad)

        # --- decoder (fully fused sequential decode loop) ---
        trg_p = jnp.pad(trg, ((0, 0), (0, b_pad - batch)))              # [T, B_pad]
        trg0 = trg_p[0][:, None]                                        # [B_pad, 1]
        trg_next = trg_p[1:][:, :, None]                                # [T-1, B_pad, 1]
        out_body = run_decoder(tf_flags, trg0, trg_next, pp["dec_emb"],
                               pp["dec_w"], pp["dec_b"], pp["fc_w"], pp["fc_b"],
                               h0, c0, n_layers=n_layers, b_pad=b_pad,
                               h_pad=h_pad, e_pad=e_pad, v_pad=v_pad,
                               v_valid=output_dim)
        out_body = out_body[:, :batch, :output_dim]
        outputs = jnp.concatenate(
            [jnp.zeros((1, batch, output_dim), jnp.float32), out_body], axis=0)
        return outputs                                                  # [T, B, V]

    return forward


# ---------------------------------------------------------------------------
# Pure-JAX reference (unpadded) for correctness check
# ---------------------------------------------------------------------------

def reference_forward(src, trg, params, tf_flags, *, hid_dim, n_layers, output_dim):
    H = hid_dim

    def lstm_step(x, hs, cs, layer_params):
        new_h, new_c = [], []
        inp = x
        for lp, h, c in zip(layer_params, hs, cs):
            gates = inp @ lp["w_ih"] + h @ lp["w_hh"] + lp["b"]
            i = jax.nn.sigmoid(gates[:, 0 * H:1 * H])
            f = jax.nn.sigmoid(gates[:, 1 * H:2 * H])
            g = jnp.tanh(gates[:, 2 * H:3 * H])
            o = jax.nn.sigmoid(gates[:, 3 * H:4 * H])
            c2 = f * c + i * g
            h2 = o * jnp.tanh(c2)
            new_h.append(h2)
            new_c.append(c2)
            inp = h2
        return inp, new_h, new_c

    S, B = src.shape
    T, _ = trg.shape
    h = [jnp.zeros((B, H), jnp.float32) for _ in range(n_layers)]
    c = [jnp.zeros((B, H), jnp.float32) for _ in range(n_layers)]
    emb = jnp.take(params["enc_emb"], src, axis=0)
    for t in range(S):
        _, h, c = lstm_step(emb[t], h, c, params["enc_lstm"])

    outputs = [jnp.zeros((B, output_dim), jnp.float32)]
    dec_input = trg[0]
    for t in range(1, T):
        x = jnp.take(params["dec_emb"], dec_input, axis=0)
        top, h, c = lstm_step(x, h, c, params["dec_lstm"])
        logits = top @ params["fc_w"] + params["fc_b"]
        outputs.append(logits)
        top1 = jnp.argmax(logits, axis=1).astype(trg.dtype)
        dec_input = jnp.where(tf_flags[t - 1] != 0, trg[t], top1)
    return jnp.stack(outputs, axis=0)


# ---------------------------------------------------------------------------
# Main
# ---------------------------------------------------------------------------

if __name__ == "__main__":
    INPUT_DIM = 24     # src vocab size
    OUTPUT_DIM = 32    # trg vocab size
    EMB_DIM = 16
    HID_DIM = 32
    N_LAYERS = 2
    BATCH = 4
    SRC_LEN = 8
    TRG_LEN = 8
    TF_RATIO = 0.5

    # hardware-aligned padded dims
    B_PAD = _round_up(BATCH, 8)
    E_PAD = _round_up(EMB_DIM, 128)
    H_PAD = _round_up(HID_DIM, 128)
    V_PAD = _round_up(OUTPUT_DIM, 128)

    root = jax.random.PRNGKey(0)
    k_par, k_src, k_trg, k_tf = jax.random.split(root, 4)

    params = make_params(k_par, input_dim=INPUT_DIM, output_dim=OUTPUT_DIM,
                         emb_dim=EMB_DIM, hid_dim=HID_DIM, n_layers=N_LAYERS)
    pp = pad_params(params, input_dim=INPUT_DIM, output_dim=OUTPUT_DIM,
                    emb_dim=EMB_DIM, hid_dim=HID_DIM, n_layers=N_LAYERS,
                    e_pad=E_PAD, h_pad=H_PAD, v_pad=V_PAD)

    src = jax.random.randint(k_src, (SRC_LEN, BATCH), 0, INPUT_DIM, jnp.int32)
    trg = jax.random.randint(k_trg, (TRG_LEN, BATCH), 0, OUTPUT_DIM, jnp.int32)

    # deterministic per-step teacher-forcing decisions (flags for t = 1..T-1)
    tf_draw = jax.random.uniform(k_tf, (TRG_LEN,))
    tf_flags = (tf_draw < TF_RATIO).astype(jnp.int32)[1:]

    forward = build_forward(n_layers=N_LAYERS, output_dim=OUTPUT_DIM, batch=BATCH,
                            b_pad=B_PAD, e_pad=E_PAD, h_pad=H_PAD, v_pad=V_PAD)

    outputs = forward(src, trg, pp, tf_flags)
    outputs = jax.block_until_ready(outputs)

    assert outputs.shape == (TRG_LEN, BATCH, OUTPUT_DIM)
    assert outputs.dtype == jnp.float32
    assert bool(jnp.all(outputs[0] == 0.0))
    assert bool(jnp.all(jnp.isfinite(outputs)))

    # correctness vs pure-JAX reference (same params / teacher-forcing flags)
    ref = reference_forward(src, trg, params, tf_flags,
                            hid_dim=HID_DIM, n_layers=N_LAYERS, output_dim=OUTPUT_DIM)
    max_err = float(jnp.max(jnp.abs(outputs - ref)))
    assert max_err < 1e-3, f"mismatch vs reference: {max_err}"

    print("KERNEL_OK")
</pallas_src>

<mosaic_0001>
module attributes {stable_mosaic.version = 11 : i64} {
  func.func @kernel(%arg0: i32, %arg1: memref<1x8x128xf32, #tpu.memory_space<vmem>>, %arg2: memref<2x256x512xf32, #tpu.memory_space<vmem>>, %arg3: memref<2x1x512xf32, #tpu.memory_space<vmem>>, %arg4: memref<2x8x128xf32, #tpu.memory_space<vmem>>, %arg5: memref<2x8x128xf32, #tpu.memory_space<vmem>>) attributes {dimension_semantics = [#tpu.dimension_semantics<arbitrary>], iteration_bounds = array<i64: 8>, scalar_prefetch = 0 : i64, scratch_operands = 0 : i64, tpu.core_type = #tpu.core_type<tc>, window_params = [{transform_indices = @transform_0, window_bounds = array<i64: 1, 8, 128>}, {pipeline_mode = #tpu.pipeline_mode<synchronous>, transform_indices = @transform_1, window_bounds = array<i64: 2, 256, 512>}, {pipeline_mode = #tpu.pipeline_mode<synchronous>, transform_indices = @transform_2, window_bounds = array<i64: 2, 1, 512>}, {pipeline_mode = #tpu.pipeline_mode<synchronous>, transform_indices = @transform_3, window_bounds = array<i64: 2, 8, 128>}, {pipeline_mode = #tpu.pipeline_mode<synchronous>, transform_indices = @transform_4, window_bounds = array<i64: 2, 8, 128>}]} {
    %c0_i32 = arith.constant 0 : i32
    %0 = arith.cmpi eq, %arg0, %c0_i32 : i32
    %1 = arith.extui %0 : i1 to i32
    %c0_i32_0 = arith.constant 0 : i32
    %2 = arith.cmpi ne, %1, %c0_i32_0 : i32
    scf.if %2 {
      %cst_45 = arith.constant 0.000000e+00 : f32
      %91 = vector.broadcast %cst_45 : f32 to vector<2x8x128xf32>
      %c0_46 = arith.constant 0 : index
      %c0_47 = arith.constant 0 : index
      %c0_48 = arith.constant 0 : index
      %92 = vector.load %arg4[%c0_46, %c0_47, %c0_48] : memref<2x8x128xf32, #tpu.memory_space<vmem>>, vector<2x8x128xf32>
      tpu.vector_store %arg4[%c0_46, %c0_47, %c0_48], %91 {strides = array<i32>} : memref<2x8x128xf32, #tpu.memory_space<vmem>>, vector<2x8x128xf32>,
      %cst_49 = arith.constant 0.000000e+00 : f32
      %93 = vector.broadcast %cst_49 : f32 to vector<2x8x128xf32>
      %c0_50 = arith.constant 0 : index
      %c0_51 = arith.constant 0 : index
      %c0_52 = arith.constant 0 : index
      %94 = vector.load %arg5[%c0_50, %c0_51, %c0_52] : memref<2x8x128xf32, #tpu.memory_space<vmem>>, vector<2x8x128xf32>
      tpu.vector_store %arg5[%c0_50, %c0_51, %c0_52], %93 {strides = array<i32>} : memref<2x8x128xf32, #tpu.memory_space<vmem>>, vector<2x8x128xf32>,
    } else {
    }
    %c0 = arith.constant 0 : index
    %c0_1 = arith.constant 0 : index
    %c0_2 = arith.constant 0 : index
    %3 = vector.load %arg1[%c0, %c0_1, %c0_2] : memref<1x8x128xf32, #tpu.memory_space<vmem>>, vector<1x8x128xf32>
    %4 = vector.shape_cast %3 : vector<1x8x128xf32> to vector<8x128xf32>
    %c0_3 = arith.constant 0 : index
    %c0_4 = arith.constant 0 : index
    %c0_5 = arith.constant 0 : index
    %5 = vector.load %arg4[%c0_3, %c0_4, %c0_5] : memref<2x8x128xf32, #tpu.memory_space<vmem>>, vector<1x8x128xf32>
    %6 = vector.shape_cast %5 : vector<1x8x128xf32> to vector<8x128xf32>
    %c0_6 = arith.constant 0 : index
    %c0_7 = arith.constant 0 : index
    %c0_8 = arith.constant 0 : index
    %7 = vector.load %arg5[%c0_6, %c0_7, %c0_8] : memref<2x8x128xf32, #tpu.memory_space<vmem>>, vector<1x8x128xf32>
    %8 = vector.shape_cast %7 : vector<1x8x128xf32> to vector<8x128xf32>
    %9 = tpu.concatenate %4, %6 in 1 : vector<8x128xf32>, vector<8x128xf32> -> vector<8x256xf32>
    %c0_9 = arith.constant 0 : index
    %c0_10 = arith.constant 0 : index
    %c0_11 = arith.constant 0 : index
    %10 = vector.load %arg2[%c0_9, %c0_10, %c0_11] : memref<2x256x512xf32, #tpu.memory_space<vmem>>, vector<1x256x512xf32>
    %11 = vector.shape_cast %10 : vector<1x256x512xf32> to vector<256x512xf32>
    %cst = arith.constant dense<0.000000e+00> : vector<8x512xf32>
    %12 = tpu.matmul %9, %11, %cst {dimension_numbers = #tpu.dot_dimension_numbers<[1], [0], [0], [1], [0, 0, 1, 1], [], []>} : vector<8x256xf32>, vector<256x512xf32>, vector<8x512xf32> -> vector<8x512xf32>
    %c0_12 = arith.constant 0 : index
    %c0_13 = arith.constant 0 : index
    %c0_14 = arith.constant 0 : index
    %13 = vector.load %arg3[%c0_12, %c0_13, %c0_14] : memref<2x1x512xf32, #tpu.memory_space<vmem>>, vector<1x1x512xf32>
    %14 = vector.shape_cast %13 : vector<1x1x512xf32> to vector<1x512xf32>
    %15 = vector.broadcast %14 : vector<1x512xf32> to vector<8x512xf32>
    %16 = arith.addf %12, %15 : vector<8x512xf32>
    %17 = vector.extract_strided_slice %16 {offsets = [0, 0], sizes = [8, 128], strides = [1, 1]} : vector<8x512xf32> to vector<8x128xf32>
    %18 = arith.negf %17 : vector<8x128xf32>
    %19 = math.exp %18 : vector<8x128xf32>
    %cst_15 = arith.constant 1.000000e+00 : f32
    %20 = vector.broadcast %cst_15 : f32 to vector<8x128xf32>
    %21 = arith.addf %20, %19 : vector<8x128xf32>
    %22 = arith.divf %20, %21 : vector<8x128xf32>
    %23 = vector.extract_strided_slice %16 {offsets = [0, 128], sizes = [8, 128], strides = [1, 1]} : vector<8x512xf32> to vector<8x128xf32>
    %24 = arith.negf %23 : vector<8x128xf32>
    %25 = math.exp %24 : vector<8x128xf32>
    %cst_16 = arith.constant 1.000000e+00 : f32
    %26 = vector.broadcast %cst_16 : f32 to vector<8x128xf32>
    %27 = arith.addf %26, %25 : vector<8x128xf32>
    %28 = arith.divf %26, %27 : vector<8x128xf32>
    %29 = vector.extract_strided_slice %16 {offsets = [0, 256], sizes = [8, 128], strides = [1, 1]} : vector<8x512xf32> to vector<8x128xf32>
    %30 = math.tanh %29 : vector<8x128xf32>
    %31 = vector.extract_strided_slice %16 {offsets = [0, 384], sizes = [8, 128], strides = [1, 1]} : vector<8x512xf32> to vector<8x128xf32>
    %32 = arith.negf %31 : vector<8x128xf32>
    %33 = math.exp %32 : vector<8x128xf32>
    %cst_17 = arith.constant 1.000000e+00 : f32
    %34 = vector.broadcast %cst_17 : f32 to vector<8x128xf32>
    %35 = arith.addf %34, %33 : vector<8x128xf32>
    %36 = arith.divf %34, %35 : vector<8x128xf32>
    %37 = arith.mulf %28, %8 : vector<8x128xf32>
    %38 = arith.mulf %22, %30 : vector<8x128xf32>
    %39 = arith.addf %37, %38 : vector<8x128xf32>
    %40 = math.tanh %39 : vector<8x128xf32>
    %41 = arith.mulf %36, %40 : vector<8x128xf32>
    %c0_18 = arith.constant 0 : index
    %c0_19 = arith.constant 0 : index
    %c0_20 = arith.constant 0 : index
    %42 = vector.load %arg4[%c0_18, %c0_19, %c0_20] : memref<2x8x128xf32, #tpu.memory_space<vmem>>, vector<1x8x128xf32>
    %43 = vector.shape_cast %42 : vector<1x8x128xf32> to vector<8x128xf32>
    %44 = vector.shape_cast %41 : vector<8x128xf32> to vector<1x8x128xf32>
    tpu.vector_store %arg4[%c0_18, %c0_19, %c0_20], %44 {strides = array<i32>} : memref<2x8x128xf32, #tpu.memory_space<vmem>>, vector<1x8x128xf32>,
    %c0_21 = arith.constant 0 : index
    %c0_22 = arith.constant 0 : index
    %c0_23 = arith.constant 0 : index
    %45 = vector.load %arg5[%c0_21, %c0_22, %c0_23] : memref<2x8x128xf32, #tpu.memory_space<vmem>>, vector<1x8x128xf32>
    %46 = vector.shape_cast %45 : vector<1x8x128xf32> to vector<8x128xf32>
    %47 = vector.shape_cast %39 : vector<8x128xf32> to vector<1x8x128xf32>
    tpu.vector_store %arg5[%c0_21, %c0_22, %c0_23], %47 {strides = array<i32>} : memref<2x8x128xf32, #tpu.memory_space<vmem>>, vector<1x8x128xf32>,
    %c1 = arith.constant 1 : index
    %c0_24 = arith.constant 0 : index
    %c0_25 = arith.constant 0 : index
    %48 = vector.load %arg4[%c1, %c0_24, %c0_25] : memref<2x8x128xf32, #tpu.memory_space<vmem>>, vector<1x8x128xf32>
    %49 = vector.shape_cast %48 : vector<1x8x128xf32> to vector<8x128xf32>
    %c1_26 = arith.constant 1 : index
    %c0_27 = arith.constant 0 : index
    %c0_28 = arith.constant 0 : index
    %50 = vector.load %arg5[%c1_26, %c0_27, %c0_28] : memref<2x8x128xf32, #tpu.memory_space<vmem>>, vector<1x8x128xf32>
    %51 = vector.shape_cast %50 : vector<1x8x128xf32> to vector<8x128xf32>
    %52 = tpu.concatenate %41, %49 in 1 : vector<8x128xf32>, vector<8x128xf32> -> vector<8x256xf32>
    %c1_29 = arith.constant 1 : index
    %c0_30 = arith.constant 0 : index
    %c0_31 = arith.constant 0 : index
    %53 = vector.load %arg2[%c1_29, %c0_30, %c0_31] : memref<2x256x512xf32, #tpu.memory_space<vmem>>, vector<1x256x512xf32>
    %54 = vector.shape_cast %53 : vector<1x256x512xf32> to vector<256x512xf32>
    %cst_32 = arith.constant dense<0.000000e+00> : vector<8x512xf32>
    %55 = tpu.matmul %52, %54, %cst_32 {dimension_numbers = #tpu.dot_dimension_numbers<[1], [0], [0], [1], [0, 0, 1, 1], [], []>} : vector<8x256xf32>, vector<256x512xf32>, vector<8x512xf32> -> vector<8x512xf32>
    %c1_33 = arith.constant 1 : index
    %c0_34 = arith.constant 0 : index
    %c0_35 = arith.constant 0 : index
    %56 = vector.load %arg3[%c1_33, %c0_34, %c0_35] : memref<2x1x512xf32, #tpu.memory_space<vmem>>, vector<1x1x512xf32>
    %57 = vector.shape_cast %56 : vector<1x1x512xf32> to vector<1x512xf32>
    %58 = vector.broadcast %57 : vector<1x512xf32> to vector<8x512xf32>
    %59 = arith.addf %55, %58 : vector<8x512xf32>
    %60 = vector.extract_strided_slice %59 {offsets = [0, 0], sizes = [8, 128], strides = [1, 1]} : vector<8x512xf32> to vector<8x128xf32>
    %61 = arith.negf %60 : vector<8x128xf32>
    %62 = math.exp %61 : vector<8x128xf32>
    %cst_36 = arith.constant 1.000000e+00 : f32
    %63 = vector.broadcast %cst_36 : f32 to vector<8x128xf32>
    %64 = arith.addf %63, %62 : vector<8x128xf32>
    %65 = arith.divf %63, %64 : vector<8x128xf32>
    %66 = vector.extract_strided_slice %59 {offsets = [0, 128], sizes = [8, 128], strides = [1, 1]} : vector<8x512xf32> to vector<8x128xf32>
    %67 = arith.negf %66 : vector<8x128xf32>
    %68 = math.exp %67 : vector<8x128xf32>
    %cst_37 = arith.constant 1.000000e+00 : f32
    %69 = vector.broadcast %cst_37 : f32 to vector<8x128xf32>
    %70 = arith.addf %69, %68 : vector<8x128xf32>
    %71 = arith.divf %69, %70 : vector<8x128xf32>
    %72 = vector.extract_strided_slice %59 {offsets = [0, 256], sizes = [8, 128], strides = [1, 1]} : vector<8x512xf32> to vector<8x128xf32>
    %73 = math.tanh %72 : vector<8x128xf32>
    %74 = vector.extract_strided_slice %59 {offsets = [0, 384], sizes = [8, 128], strides = [1, 1]} : vector<8x512xf32> to vector<8x128xf32>
    %75 = arith.negf %74 : vector<8x128xf32>
    %76 = math.exp %75 : vector<8x128xf32>
    %cst_38 = arith.constant 1.000000e+00 : f32
    %77 = vector.broadcast %cst_38 : f32 to vector<8x128xf32>
    %78 = arith.addf %77, %76 : vector<8x128xf32>
    %79 = arith.divf %77, %78 : vector<8x128xf32>
    %80 = arith.mulf %71, %51 : vector<8x128xf32>
    %81 = arith.mulf %65, %73 : vector<8x128xf32>
    %82 = arith.addf %80, %81 : vector<8x128xf32>
    %83 = math.tanh %82 : vector<8x128xf32>
    %84 = arith.mulf %79, %83 : vector<8x128xf32>
    %c1_39 = arith.constant 1 : index
    %c0_40 = arith.constant 0 : index
    %c0_41 = arith.constant 0 : index
    %85 = vector.load %arg4[%c1_39, %c0_40, %c0_41] : memref<2x8x128xf32, #tpu.memory_space<vmem>>, vector<1x8x128xf32>
    %86 = vector.shape_cast %85 : vector<1x8x128xf32> to vector<8x128xf32>
    %87 = vector.shape_cast %84 : vector<8x128xf32> to vector<1x8x128xf32>
    tpu.vector_store %arg4[%c1_39, %c0_40, %c0_41], %87 {strides = array<i32>} : memref<2x8x128xf32, #tpu.memory_space<vmem>>, vector<1x8x128xf32>,
    %c1_42 = arith.constant 1 : index
    %c0_43 = arith.constant 0 : index
    %c0_44 = arith.constant 0 : index
    %88 = vector.load %arg5[%c1_42, %c0_43, %c0_44] : memref<2x8x128xf32, #tpu.memory_space<vmem>>, vector<1x8x128xf32>
    %89 = vector.shape_cast %88 : vector<1x8x128xf32> to vector<8x128xf32>
    %90 = vector.shape_cast %82 : vector<8x128xf32> to vector<1x8x128xf32>
    tpu.vector_store %arg5[%c1_42, %c0_43, %c0_44], %90 {strides = array<i32>} : memref<2x8x128xf32, #tpu.memory_space<vmem>>, vector<1x8x128xf32>,
    return
  }
  func.func @transform_0(%arg0: i32) -> (i32, i32, i32) {
    %c0_i32 = arith.constant 0 : i32
    %c0_i32_0 = arith.constant 0 : i32
    %c0_i32_1 = arith.constant 0 : i32
    return %arg0, %c0_i32, %c0_i32_0 : i32, i32, i32
  }
  func.func @transform_1(%arg0: i32) -> (i32, i32, i32) {
    %c0_i32 = arith.constant 0 : i32
    %c0_i32_0 = arith.constant 0 : i32
    %c0_i32_1 = arith.constant 0 : i32
    %c0_i32_2 = arith.constant 0 : i32
    return %c0_i32, %c0_i32_0, %c0_i32_1 : i32, i32, i32
  }
  func.func @transform_2(%arg0: i32) -> (i32, i32, i32) {
    %c0_i32 = arith.constant 0 : i32
    %c0_i32_0 = arith.constant 0 : i32
    %c0_i32_1 = arith.constant 0 : i32
    %c0_i32_2 = arith.constant 0 : i32
    return %c0_i32, %c0_i32_0, %c0_i32_1 : i32, i32, i32
  }
  func.func @transform_3(%arg0: i32) -> (i32, i32, i32) {
    %c0_i32 = arith.constant 0 : i32
    %c0_i32_0 = arith.constant 0 : i32
    %c0_i32_1 = arith.constant 0 : i32
    %c0_i32_2 = arith.constant 0 : i32
    return %c0_i32, %c0_i32_0, %c0_i32_1 : i32, i32, i32
  }
  func.func @transform_4(%arg0: i32) -> (i32, i32, i32) {
    %c0_i32 = arith.constant 0 : i32
    %c0_i32_0 = arith.constant 0 : i32
    %c0_i32_1 = arith.constant 0 : i32
    %c0_i32_2 = arith.constant 0 : i32
    return %c0_i32, %c0_i32_0, %c0_i32_1 : i32, i32, i32
  }
}

module attributes {stable_mosaic.version = 11 : i64} {
  func.func @kernel(%arg0: i32, %arg1: memref<7xi32, #tpu.memory_space<smem>>, %arg2: memref<8x1xi32, #tpu.memory_space<vmem>>, %arg3: memref<1x8x1xi32, #tpu.memory_space<vmem>>, %arg4: memref<128x128xf32, #tpu.memory_space<vmem>>, %arg5: memref<2x256x512xf32, #tpu.memory_space<vmem>>, %arg6: memref<2x1x512xf32, #tpu.memory_space<vmem>>, %arg7: memref<128x128xf32, #tpu.memory_space<vmem>>, %arg8: memref<1x128xf32, #tpu.memory_space<vmem>>, %arg9: memref<2x8x128xf32, #tpu.memory_space<vmem>>, %arg10: memref<2x8x128xf32, #tpu.memory_space<vmem>>, %arg11: memref<1x8x128xf32, #tpu.memory_space<vmem>>, %arg12: memref<2x8x128xf32, #tpu.memory_space<vmem>>, %arg13: memref<2x8x128xf32, #tpu.memory_space<vmem>>, %arg14: memref<8x1xi32, #tpu.memory_space<vmem>>) attributes {dimension_semantics = [#tpu.dimension_semantics<arbitrary>], iteration_bounds = array<i64: 7>, scalar_prefetch = 1 : i64, scratch_operands = 3 : i64, tpu.core_type = #tpu.core_type<tc>, window_params = [{pipeline_mode = #tpu.pipeline_mode<synchronous>, transform_indices = @transform_0, window_bounds = array<i64: 8, 1>}, {transform_indices = @transform_1, window_bounds = array<i64: 1, 8, 1>}, {pipeline_mode = #tpu.pipeline_mode<synchronous>, transform_indices = @transform_2, window_bounds = array<i64: 128, 128>}, {pipeline_mode = #tpu.pipeline_mode<synchronous>, transform_indices = @transform_3, window_bounds = array<i64: 2, 256, 512>}, {pipeline_mode = #tpu.pipeline_mode<synchronous>, transform_indices = @transform_4, window_bounds = array<i64: 2, 1, 512>}, {pipeline_mode = #tpu.pipeline_mode<synchronous>, transform_indices = @transform_5, window_bounds = array<i64: 128, 128>}, {pipeline_mode = #tpu.pipeline_mode<synchronous>, transform_indices = @transform_6, window_bounds = array<i64: 1, 128>}, {pipeline_mode = #tpu.pipeline_mode<synchronous>, transform_indices = @transform_7, window_bounds = array<i64: 2, 8, 128>}, {pipeline_mode = #tpu.pipeline_mode<synchronous>, transform_indices = @transform_8, window_bounds = array<i64: 2, 8, 128>}, {transform_indices = @transform_9, window_bounds = array<i64: 1, 8, 128>}]} {
    %c0_i32 = arith.constant 0 : i32
    %0 = arith.cmpi eq, %arg0, %c0_i32 : i32
    %1 = arith.extui %0 : i1 to i32
    %c0_i32_0 = arith.constant 0 : i32
    %2 = arith.cmpi ne, %1, %c0_i32_0 : i32
    scf.if %2 {
      %c0_64 = arith.constant 0 : index
      %c0_65 = arith.constant 0 : index
      %c0_66 = arith.constant 0 : index
      %130 = vector.load %arg9[%c0_64, %c0_65, %c0_66] : memref<2x8x128xf32, #tpu.memory_space<vmem>>, vector<2x8x128xf32>
      %c0_67 = arith.constant 0 : index
      %c0_68 = arith.constant 0 : index
      %c0_69 = arith.constant 0 : index
      %131 = vector.load %arg12[%c0_67, %c0_68, %c0_69] : memref<2x8x128xf32, #tpu.memory_space<vmem>>, vector<2x8x128xf32>
      tpu.vector_store %arg12[%c0_67, %c0_68, %c0_69], %130 {strides = array<i32>} : memref<2x8x128xf32, #tpu.memory_space<vmem>>, vector<2x8x128xf32>,
      %c0_70 = arith.constant 0 : index
      %c0_71 = arith.constant 0 : index
      %c0_72 = arith.constant 0 : index
      %132 = vector.load %arg10[%c0_70, %c0_71, %c0_72] : memref<2x8x128xf32, #tpu.memory_space<vmem>>, vector<2x8x128xf32>
      %c0_73 = arith.constant 0 : index
      %c0_74 = arith.constant 0 : index
      %c0_75 = arith.constant 0 : index
      %133 = vector.load %arg13[%c0_73, %c0_74, %c0_75] : memref<2x8x128xf32, #tpu.memory_space<vmem>>, vector<2x8x128xf32>
      tpu.vector_store %arg13[%c0_73, %c0_74, %c0_75], %132 {strides = array<i32>} : memref<2x8x128xf32, #tpu.memory_space<vmem>>, vector<2x8x128xf32>,
      %c0_76 = arith.constant 0 : index
      %c0_77 = arith.constant 0 : index
      %134 = vector.load %arg2[%c0_76, %c0_77] : memref<8x1xi32, #tpu.memory_space<vmem>>, vector<8x1xi32>
      %c0_78 = arith.constant 0 : index
      %c0_79 = arith.constant 0 : index
      %135 = vector.load %arg14[%c0_78, %c0_79] : memref<8x1xi32, #tpu.memory_space<vmem>>, vector<8x1xi32>
      tpu.vector_store %arg14[%c0_78, %c0_79], %134 {strides = array<i32>} : memref<8x1xi32, #tpu.memory_space<vmem>>, vector<8x1xi32>,
    } else {
    }
    %c0 = arith.constant 0 : index
    %c0_1 = arith.constant 0 : index
    %3 = vector.load %arg14[%c0, %c0_1] : memref<8x1xi32, #tpu.memory_space<vmem>>, vector<8x1xi32>
    %4 = tpu.iota {dimensions = array<i32: 1>} : vector<8x128xi32>
    %5 = vector.broadcast %3 : vector<8x1xi32> to vector<8x128xi32>
    %6 = arith.cmpi eq, %4, %5 : vector<8x128xi32>
    %7 = arith.extui %6 : vector<8x128xi1> to vector<8x128xi32>
    %8 = arith.sitofp %7 : vector<8x128xi32> to vector<8x128xf32>
    %c0_2 = arith.constant 0 : index
    %c0_3 = arith.constant 0 : index
    %9 = vector.load %arg4[%c0_2, %c0_3] : memref<128x128xf32, #tpu.memory_space<vmem>>, vector<128x128xf32>
    %cst = arith.constant dense<0.000000e+00> : vector<8x128xf32>
    %10 = tpu.matmul %8, %9, %cst {dimension_numbers = #tpu.dot_dimension_numbers<[1], [0], [0], [1], [0, 0, 1, 1], [], []>} : vector<8x128xf32>, vector<128x128xf32>, vector<8x128xf32> -> vector<8x128xf32>
    %c0_4 = arith.constant 0 : index
    %c0_5 = arith.constant 0 : index
    %c0_6 = arith.constant 0 : index
    %11 = vector.load %arg12[%c0_4, %c0_5, %c0_6] : memref<2x8x128xf32, #tpu.memory_space<vmem>>, vector<1x8x128xf32>
    %12 = vector.shape_cast %11 : vector<1x8x128xf32> to vector<8x128xf32>
    %c0_7 = arith.constant 0 : index
    %c0_8 = arith.constant 0 : index
    %c0_9 = arith.constant 0 : index
    %13 = vector.load %arg13[%c0_7, %c0_8, %c0_9] : memref<2x8x128xf32, #tpu.memory_space<vmem>>, vector<1x8x128xf32>
    %14 = vector.shape_cast %13 : vector<1x8x128xf32> to vector<8x128xf32>
    %15 = tpu.concatenate %10, %12 in 1 : vector<8x128xf32>, vector<8x128xf32> -> vector<8x256xf32>
    %c0_10 = arith.constant 0 : index
    %c0_11 = arith.constant 0 : index
    %c0_12 = arith.constant 0 : index
    %16 = vector.load %arg5[%c0_10, %c0_11, %c0_12] : memref<2x256x512xf32, #tpu.memory_space<vmem>>, vector<1x256x512xf32>
    %17 = vector.shape_cast %16 : vector<1x256x512xf32> to vector<256x512xf32>
    %cst_13 = arith.constant dense<0.000000e+00> : vector<8x512xf32>
    %18 = tpu.matmul %15, %17, %cst_13 {dimension_numbers = #tpu.dot_dimension_numbers<[1], [0], [0], [1], [0, 0, 1, 1], [], []>} : vector<8x256xf32>, vector<256x512xf32>, vector<8x512xf32> -> vector<8x512xf32>
    %c0_14 = arith.constant 0 : index
    %c0_15 = arith.constant 0 : index
    %c0_16 = arith.constant 0 : index
    %19 = vector.load %arg6[%c0_14, %c0_15, %c0_16] : memref<2x1x512xf32, #tpu.memory_space<vmem>>, vector<1x1x512xf32>
    %20 = vector.shape_cast %19 : vector<1x1x512xf32> to vector<1x512xf32>
    %21 = vector.broadcast %20 : vector<1x512xf32> to vector<8x512xf32>
    %22 = arith.addf %18, %21 : vector<8x512xf32>
    %23 = vector.extract_strided_slice %22 {offsets = [0, 0], sizes = [8, 128], strides = [1, 1]} : vector<8x512xf32> to vector<8x128xf32>
    %24 = arith.negf %23 : vector<8x128xf32>
    %25 = math.exp %24 : vector<8x128xf32>
    %cst_17 = arith.constant 1.000000e+00 : f32
    %26 = vector.broadcast %cst_17 : f32 to vector<8x128xf32>
    %27 = arith.addf %26, %25 : vector<8x128xf32>
    %28 = arith.divf %26, %27 : vector<8x128xf32>
    %29 = vector.extract_strided_slice %22 {offsets = [0, 128], sizes = [8, 128], strides = [1, 1]} : vector<8x512xf32> to vector<8x128xf32>
    %30 = arith.negf %29 : vector<8x128xf32>
    %31 = math.exp %30 : vector<8x128xf32>
    %cst_18 = arith.constant 1.000000e+00 : f32
    %32 = vector.broadcast %cst_18 : f32 to vector<8x128xf32>
    %33 = arith.addf %32, %31 : vector<8x128xf32>
    %34 = arith.divf %32, %33 : vector<8x128xf32>
    %35 = vector.extract_strided_slice %22 {offsets = [0, 256], sizes = [8, 128], strides = [1, 1]} : vector<8x512xf32> to vector<8x128xf32>
    %36 = math.tanh %35 : vector<8x128xf32>
    %37 = vector.extract_strided_slice %22 {offsets = [0, 384], sizes = [8, 128], strides = [1, 1]} : vector<8x512xf32> to vector<8x128xf32>
    %38 = arith.negf %37 : vector<8x128xf32>
    %39 = math.exp %38 : vector<8x128xf32>
    %cst_19 = arith.constant 1.000000e+00 : f32
    %40 = vector.broadcast %cst_19 : f32 to vector<8x128xf32>
    %41 = arith.addf %40, %39 : vector<8x128xf32>
    %42 = arith.divf %40, %41 : vector<8x128xf32>
    %43 = arith.mulf %34, %14 : vector<8x128xf32>
    %44 = arith.mulf %28, %36 : vector<8x128xf32>
    %45 = arith.addf %43, %44 : vector<8x128xf32>
    %46 = math.tanh %45 : vector<8x128xf32>
    %47 = arith.mulf %42, %46 : vector<8x128xf32>
    %c0_20 = arith.constant 0 : index
    %c0_21 = arith.constant 0 : index
    %c0_22 = arith.constant 0 : index
    %48 = vector.load %arg12[%c0_20, %c0_21, %c0_22] : memref<2x8x128xf32, #tpu.memory_space<vmem>>, vector<1x8x128xf32>
    %49 = vector.shape_cast %48 : vector<1x8x128xf32> to vector<8x128xf32>
    %50 = vector.shape_cast %47 : vector<8x128xf32> to vector<1x8x128xf32>
    tpu.vector_store %arg12[%c0_20, %c0_21, %c0_22], %50 {strides = array<i32>} : memref<2x8x128xf32, #tpu.memory_space<vmem>>, vector<1x8x128xf32>,
    %c0_23 = arith.constant 0 : index
    %c0_24 = arith.constant 0 : index
    %c0_25 = arith.constant 0 : index
    %51 = vector.load %arg13[%c0_23, %c0_24, %c0_25] : memref<2x8x128xf32, #tpu.memory_space<vmem>>, vector<1x8x128xf32>
    %52 = vector.shape_cast %51 : vector<1x8x128xf32> to vector<8x128xf32>
    %53 = vector.shape_cast %45 : vector<8x128xf32> to vector<1x8x128xf32>
    tpu.vector_store %arg13[%c0_23, %c0_24, %c0_25], %53 {strides = array<i32>} : memref<2x8x128xf32, #tpu.memory_space<vmem>>, vector<1x8x128xf32>,
    %c1 = arith.constant 1 : index
    %c0_26 = arith.constant 0 : index
    %c0_27 = arith.constant 0 : index
    %54 = vector.load %arg12[%c1, %c0_26, %c0_27] : memref<2x8x128xf32, #tpu.memory_space<vmem>>, vector<1x8x128xf32>
    %55 = vector.shape_cast %54 : vector<1x8x128xf32> to vector<8x128xf32>
    %c1_28 = arith.constant 1 : index
    %c0_29 = arith.constant 0 : index
    %c0_30 = arith.constant 0 : index
    %56 = vector.load %arg13[%c1_28, %c0_29, %c0_30] : memref<2x8x128xf32, #tpu.memory_space<vmem>>, vector<1x8x128xf32>
    %57 = vector.shape_cast %56 : vector<1x8x128xf32> to vector<8x128xf32>
    %58 = tpu.concatenate %47, %55 in 1 : vector<8x128xf32>, vector<8x128xf32> -> vector<8x256xf32>
    %c1_31 = arith.constant 1 : index
    %c0_32 = arith.constant 0 : index
    %c0_33 = arith.constant 0 : index
    %59 = vector.load %arg5[%c1_31, %c0_32, %c0_33] : memref<2x256x512xf32, #tpu.memory_space<vmem>>, vector<1x256x512xf32>
    %60 = vector.shape_cast %59 : vector<1x256x512xf32> to vector<256x512xf32>
    %cst_34 = arith.constant dense<0.000000e+00> : vector<8x512xf32>
    %61 = tpu.matmul %58, %60, %cst_34 {dimension_numbers = #tpu.dot_dimension_numbers<[1], [0], [0], [1], [0, 0, 1, 1], [], []>} : vector<8x256xf32>, vector<256x512xf32>, vector<8x512xf32> -> vector<8x512xf32>
    %c1_35 = arith.constant 1 : index
    %c0_36 = arith.constant 0 : index
    %c0_37 = arith.constant 0 : index
    %62 = vector.load %arg6[%c1_35, %c0_36, %c0_37] : memref<2x1x512xf32, #tpu.memory_space<vmem>>, vector<1x1x512xf32>
    %63 = vector.shape_cast %62 : vector<1x1x512xf32> to vector<1x512xf32>
    %64 = vector.broadcast %63 : vector<1x512xf32> to vector<8x512xf32>
    %65 = arith.addf %61, %64 : vector<8x512xf32>
    %66 = vector.extract_strided_slice %65 {offsets = [0, 0], sizes = [8, 128], strides = [1, 1]} : vector<8x512xf32> to vector<8x128xf32>
    %67 = arith.negf %66 : vector<8x128xf32>
    %68 = math.exp %67 : vector<8x128xf32>
    %cst_38 = arith.constant 1.000000e+00 : f32
    %69 = vector.broadcast %cst_38 : f32 to vector<8x128xf32>
    %70 = arith.addf %69, %68 : vector<8x128xf32>
    %71 = arith.divf %69, %70 : vector<8x128xf32>
    %72 = vector.extract_strided_slice %65 {offsets = [0, 128], sizes = [8, 128], strides = [1, 1]} : vector<8x512xf32> to vector<8x128xf32>
    %73 = arith.negf %72 : vector<8x128xf32>
    %74 = math.exp %73 : vector<8x128xf32>
    %cst_39 = arith.constant 1.000000e+00 : f32
    %75 = vector.broadcast %cst_39 : f32 to vector<8x128xf32>
    %76 = arith.addf %75, %74 : vector<8x128xf32>
    %77 = arith.divf %75, %76 : vector<8x128xf32>
    %78 = vector.extract_strided_slice %65 {offsets = [0, 256], sizes = [8, 128], strides = [1, 1]} : vector<8x512xf32> to vector<8x128xf32>
    %79 = math.tanh %78 : vector<8x128xf32>
    %80 = vector.extract_strided_slice %65 {offsets = [0, 384], sizes = [8, 128], strides = [1, 1]} : vector<8x512xf32> to vector<8x128xf32>
    %81 = arith.negf %80 : vector<8x128xf32>
    %82 = math.exp %81 : vector<8x128xf32>
    %cst_40 = arith.constant 1.000000e+00 : f32
    %83 = vector.broadcast %cst_40 : f32 to vector<8x128xf32>
    %84 = arith.addf %83, %82 : vector<8x128xf32>
    %85 = arith.divf %83, %84 : vector<8x128xf32>
    %86 = arith.mulf %77, %57 : vector<8x128xf32>
    %87 = arith.mulf %71, %79 : vector<8x128xf32>
    %88 = arith.addf %86, %87 : vector<8x128xf32>
    %89 = math.tanh %88 : vector<8x128xf32>
    %90 = arith.mulf %85, %89 : vector<8x128xf32>
    %c1_41 = arith.constant 1 : index
    %c0_42 = arith.constant 0 : index
    %c0_43 = arith.constant 0 : index
    %91 = vector.load %arg12[%c1_41, %c0_42, %c0_43] : memref<2x8x128xf32, #tpu.memory_space<vmem>>, vector<1x8x128xf32>
    %92 = vector.shape_cast %91 : vector<1x8x128xf32> to vector<8x128xf32>
    %93 = vector.shape_cast %90 : vector<8x128xf32> to vector<1x8x128xf32>
    tpu.vector_store %arg12[%c1_41, %c0_42, %c0_43], %93 {strides = array<i32>} : memref<2x8x128xf32, #tpu.memory_space<vmem>>, vector<1x8x128xf32>,
    %c1_44 = arith.constant 1 : index
    %c0_45 = arith.constant 0 : index
    %c0_46 = arith.constant 0 : index
    %94 = vector.load %arg13[%c1_44, %c0_45, %c0_46] : memref<2x8x128xf32, #tpu.memory_space<vmem>>, vector<1x8x128xf32>
    %95 = vector.shape_cast %94 : vector<1x8x128xf32> to vector<8x128xf32>
    %96 = vector.shape_cast %88 : vector<8x128xf32> to vector<1x8x128xf32>
    tpu.vector_store %arg13[%c1_44, %c0_45, %c0_46], %96 {strides = array<i32>} : memref<2x8x128xf32, #tpu.memory_space<vmem>>, vector<1x8x128xf32>,
    %c0_47 = arith.constant 0 : index
    %c0_48 = arith.constant 0 : index
    %97 = vector.load %arg7[%c0_47, %c0_48] : memref<128x128xf32, #tpu.memory_space<vmem>>, vector<128x128xf32>
    %cst_49 = arith.constant dense<0.000000e+00> : vector<8x128xf32>
    %98 = tpu.matmul %90, %97, %cst_49 {dimension_numbers = #tpu.dot_dimension_numbers<[1], [0], [0], [1], [0, 0, 1, 1], [], []>} : vector<8x128xf32>, vector<128x128xf32>, vector<8x128xf32> -> vector<8x128xf32>
    %c0_50 = arith.constant 0 : index
    %c0_51 = arith.constant 0 : index
    %99 = vector.load %arg8[%c0_50, %c0_51] : memref<1x128xf32, #tpu.memory_space<vmem>>, vector<1x128xf32>
    %100 = vector.broadcast %99 : vector<1x128xf32> to vector<8x128xf32>
    %101 = arith.addf %98, %100 : vector<8x128xf32>
    %c0_52 = arith.constant 0 : index
    %c0_53 = arith.constant 0 : index
    %c0_54 = arith.constant 0 : index
    %102 = vector.load %arg11[%c0_52, %c0_53, %c0_54] : memref<1x8x128xf32, #tpu.memory_space<vmem>>, vector<1x8x128xf32>
    %103 = vector.shape_cast %102 : vector<1x8x128xf32> to vector<8x128xf32>
    %104 = vector.shape_cast %101 : vector<8x128xf32> to vector<1x8x128xf32>
    tpu.vector_store %arg11[%c0_52, %c0_53, %c0_54], %104 {strides = array<i32>} : memref<1x8x128xf32, #tpu.memory_space<vmem>>, vector<1x8x128xf32>,
    %c32_i32 = arith.constant 32 : i32
    %105 = vector.broadcast %c32_i32 : i32 to vector<8x128xi32>
    %106 = arith.cmpi slt, %4, %105 : vector<8x128xi32>
    %cst_55 = arith.constant 0xFF800000 : f32
    %107 = vector.broadcast %cst_55 : f32 to vector<8x128xf32>
    %108 = arith.select %106, %101, %107 : vector<8x128xi1>, vector<8x128xf32>
    %cst_56 = arith.constant dense<0xFF800000> : vector<8xf32>
    %109 = vector.multi_reduction <maximumf>, %108, %cst_56 [1] : vector<8x128xf32> to vector<8xf32>
    %110 = vector.shape_cast %109 : vector<8xf32> to vector<8x1xf32>
    %111 = vector.broadcast %110 : vector<8x1xf32> to vector<8x128xf32>
    %112 = arith.cmpf oeq, %108, %111 : vector<8x128xf32>
    %113 = arith.sitofp %4 : vector<8x128xi32> to vector<8x128xf32>
    %cst_57 = arith.constant 1.280000e+02 : f32
    %114 = vector.broadcast %cst_57 : f32 to vector<8x128xf32>
    %115 = arith.select %112, %113, %114 : vector<8x128xi1>, vector<8x128xf32>
    %cst_58 = arith.constant dense<0x7F800000> : vector<8xf32>
    %116 = vector.multi_reduction <minimumf>, %115, %cst_58 [1] : vector<8x128xf32> to vector<8xf32>
    %117 = vector.shape_cast %116 : vector<8xf32> to vector<8x1xf32>
    %118 = arith.fptosi %117 : vector<8x1xf32> to vector<8x1xi32>
    %119 = arith.index_cast %arg0 : i32 to index
    %120 = memref.load %arg1[%119] : memref<7xi32, #tpu.memory_space<smem>>
    %c0_59 = arith.constant 0 : index
    %c0_60 = arith.constant 0 : index
    %c0_61 = arith.constant 0 : index
    %121 = vector.load %arg3[%c0_59, %c0_60, %c0_61] : memref<1x8x1xi32, #tpu.memory_space<vmem>>, vector<1x8x1xi32>
    %122 = vector.shape_cast %121 : vector<1x8x1xi32> to vector<8x1xi32>
    %123 = vector.broadcast %120 : i32 to vector<8x1xi32>
    %124 = arith.muli %123, %122 : vector<8x1xi32>
    %c1_i32 = arith.constant 1 : i32
    %125 = arith.subi %c1_i32, %120 : i32
    %126 = vector.broadcast %125 : i32 to vector<8x1xi32>
    %127 = arith.muli %126, %118 : vector<8x1xi32>
    %128 = arith.addi %124, %127 : vector<8x1xi32>
    %c0_62 = arith.constant 0 : index
    %c0_63 = arith.constant 0 : index
    %129 = vector.load %arg14[%c0_62, %c0_63] : memref<8x1xi32, #tpu.memory_space<vmem>>, vector<8x1xi32>
    tpu.vector_store %arg14[%c0_62, %c0_63], %128 {strides = array<i32>} : memref<8x1xi32, #tpu.memory_space<vmem>>, vector<8x1xi32>,
    return
  }
  func.func @transform_0(%arg0: i32, %arg1: memref<7xi32, #tpu.memory_space<smem>>) -> (i32, i32) {
    %c0_i32 = arith.constant 0 : i32
    %c0_i32_0 = arith.constant 0 : i32
    %c0_i32_1 = arith.constant 0 : i32
    return %c0_i32, %c0_i32_0 : i32, i32
  }
  func.func @transform_1(%arg0: i32, %arg1: memref<7xi32, #tpu.memory_space<smem>>) -> (i32, i32, i32) {
    %c0_i32 = arith.constant 0 : i32
    %c0_i32_0 = arith.constant 0 : i32
    %c0_i32_1 = arith.constant 0 : i32
    return %arg0, %c0_i32, %c0_i32_0 : i32, i32, i32
  }
  func.func @transform_2(%arg0: i32, %arg1: memref<7xi32, #tpu.memory_space<smem>>) -> (i32, i32) {
    %c0_i32 = arith.constant 0 : i32
    %c0_i32_0 = arith.constant 0 : i32
    %c0_i32_1 = arith.constant 0 : i32
    return %c0_i32, %c0_i32_0 : i32, i32
  }
  func.func @transform_3(%arg0: i32, %arg1: memref<7xi32, #tpu.memory_space<smem>>) -> (i32, i32, i32) {
    %c0_i32 = arith.constant 0 : i32
    %c0_i32_0 = arith.constant 0 : i32
    %c0_i32_1 = arith.constant 0 : i32
    %c0_i32_2 = arith.constant 0 : i32
    return %c0_i32, %c0_i32_0, %c0_i32_1 : i32, i32, i32
  }
  func.func @transform_4(%arg0: i32, %arg1: memref<7xi32, #tpu.memory_space<smem>>) -> (i32, i32, i32) {
    %c0_i32 = arith.constant 0 : i32
    %c0_i32_0 = arith.constant 0 : i32
    %c0_i32_1 = arith.constant 0 : i32
    %c0_i32_2 = arith.constant 0 : i32
    return %c0_i32, %c0_i32_0, %c0_i32_1 : i32, i32, i32
  }
  func.func @transform_5(%arg0: i32, %arg1: memref<7xi32, #tpu.memory_space<smem>>) -> (i32, i32) {
    %c0_i32 = arith.constant 0 : i32
    %c0_i32_0 = arith.constant 0 : i32
    %c0_i32_1 = arith.constant 0 : i32
    return %c0_i32, %c0_i32_0 : i32, i32
  }
  func.func @transform_6(%arg0: i32, %arg1: memref<7xi32, #tpu.memory_space<smem>>) -> (i32, i32) {
    %c0_i32 = arith.constant 0 : i32
    %c0_i32_0 = arith.constant 0 : i32
    %c0_i32_1 = arith.constant 0 : i32
    return %c0_i32, %c0_i32_0 : i32, i32
  }
  func.func @transform_7(%arg0: i32, %arg1: memref<7xi32, #tpu.memory_space<smem>>) -> (i32, i32, i32) {
    %c0_i32 = arith.constant 0 : i32
    %c0_i32_0 = arith.constant 0 : i32
    %c0_i32_1 = arith.constant 0 : i32
    %c0_i32_2 = arith.constant 0 : i32
    return %c0_i32, %c0_i32_0, %c0_i32_1 : i32, i32, i32
  }
  func.func @transform_8(%arg0: i32, %arg1: memref<7xi32, #tpu.memory_space<smem>>) -> (i32, i32, i32) {
    %c0_i32 = arith.constant 0 : i32
    %c0_i32_0 = arith.constant 0 : i32
    %c0_i32_1 = arith.constant 0 : i32
    %c0_i32_2 = arith.constant 0 : i32
    return %c0_i32, %c0_i32_0, %c0_i32_1 : i32, i32, i32
  }
  func.func @transform_9(%arg0: i32, %arg1: memref<7xi32, #tpu.memory_space<smem>>) -> (i32, i32, i32) {
    %c0_i32 = arith.constant 0 : i32
    %c0_i32_0 = arith.constant 0 : i32
    %c0_i32_1 = arith.constant 0 : i32
    return %arg0, %c0_i32, %c0_i32_0 : i32, i32, i32
  }
}

</mosaic_0001>

<llo_original>
// kernel: forward.2
$region0: #{forward.2}
  #allocation0 [shape = 'u32[]', space=smem, size = 0x4, offset = 0x4, fixed_abs, tag = 'smem constant byte address 0x4 - core index']
  #allocation1 [shape = 'u32[144,128]{1,0:T(1,128)}', space=vmem, size = 0x12000, scoped, tag = 'internal scratch']
  %s0 = inlined_call_operand.vmem [shape: f32[8,8,128], index: 0, kind: input, shape index: {}]
  %s1 = inlined_call_operand.hbm [shape: f32[2,256,512], index: 1, kind: input, shape index: {}]
  %s2 = inlined_call_operand.vmem [shape: f32[2,1,512], index: 2, kind: input, shape index: {}]
  %s3 = inlined_call_operand.vmem [shape: f32[2,8,128], index: 3, kind: output, shape index: {0}]
  %s4 = inlined_call_operand.vmem [shape: f32[2,8,128], index: 4, kind: output, shape index: {1}]
  %5 = xla_tuple %s3, %s4
  %s6 = sld [smem:[#allocation0]]
  $region61: #{forward.2} parent=0
    _
  %s8 = ssub.s32 1, %s6
  %s9 = scalar_select 0, %s8, %s6
  $region1: #{forward.2} parent=0
    #allocation2 [shape = 'u8[1048576]{0}', space=vmem, size = 0x100000, scoped, tag = 'input window, operand 1, single buffered']
    #allocation3 [shape = 's32[2]{0}', space=sflag, size = 0x8, scoped, tag = 'scoped memory for forward.2']
    %10 = vsyncpa [#allocation3], 0
    loop: start=0, step=1, limit=10
    $region2: #{forward.2} parent=1 // loop_pre_header
      _
    $region3: #{forward.2} parent=1 // loop_header
      %s12 = sphi 0, %s16
      %p13 = scmp.ge.s32.totalorder %s12, 10
      %s22 = sphi 0, %s24
      %s25 = sphi 0, %s22
      %s26 = sphi 0, %s25
      %s42 = sphi 0, %s26
      %s46 = sphi 0, %s46
      %s48 = sphi 0, %s46
      %s49 = sphi 0, %s48
      %s63 = sphi 0, %s49
      %s67 = sphi 0, %s67
      %s69 = sphi 0, %s67
      %s70 = sphi 0, %s69
      %s84 = sphi 0, %s70
      %s88 = sphi 0, %s88
      %s90 = sphi 0, %s88
      %s91 = sphi 0, %s90
      %s105 = sphi 0, %s91
      %s109 = sphi 0, %s109
      %s111 = sphi 0, %s109
      %s112 = sphi 0, %s111
      %s126 = sphi 0, %s112
    $region4: #{forward.2} parent=1 // loop_header_branch
      %15 = sbr.rel (%p13) target = $region8
    $region5: #{forward.2} parent=1 // loop_body
      %s17 = ssub.s32 %s12, 1
      %s18 = ssub.s32 %s12, 2
      %s19 = sadd.s32 %s12, 1
      %s20 = ssub.s32 %s12, %s19
      %p21 = scmp.eq.s32.totalorder %s20, 0
      %s23 = sadd.s32 %s22, 1
      %s24 = scalar_select %p21, %s22, %s23
      %p27 = pneg %p21
      %p28 = scmp.eq.s32.totalorder %s12, 7
      %p29 = por %p27, %p28
      %p30 = scmp.ne.s32.totalorder %s22, %s25
      %p31 = scmp.eq.s32.totalorder %s12, 0
      %p32 = por %p30, %p31
      %p33 = scmp.ne.s32.totalorder %s22, %s25
      %p34 = scmp.eq.s32.totalorder %s17, 7
      %p35 = por %p33, %p34
      %p36 = scmp.ne.s32.totalorder %s25, %s26
      %p37 = scmp.eq.s32.totalorder %s17, 0
      %p38 = por %p36, %p37
      %p39 = scmp.ne.s32.totalorder %s25, %s26
      %p40 = scmp.eq.s32.totalorder %s18, 7
      %p41 = por %p39, %p40
      %p43 = scmp.ne.s32.totalorder %s26, %s42
      %p44 = scmp.eq.s32.totalorder %s18, 0
      %p45 = por %p43, %p44
      %s47 = sadd.s32 %s46, 1
      %p50 = scmp.eq.s32.totalorder %s12, 7
      %p51 = scmp.ne.s32.totalorder %s46, %s48
      %p52 = scmp.eq.s32.totalorder %s12, 0
      %p53 = por %p51, %p52
      %p54 = scmp.ne.s32.totalorder %s46, %s48
      %p55 = scmp.eq.s32.totalorder %s17, 7
      %p56 = por %p54, %p55
      %p57 = scmp.ne.s32.totalorder %s48, %s49
      %p58 = scmp.eq.s32.totalorder %s17, 0
      %p59 = por %p57, %p58
      %p60 = scmp.ne.s32.totalorder %s48, %s49
      %p61 = scmp.eq.s32.totalorder %s18, 7
      %p62 = por %p60, %p61
      %p64 = scmp.ne.s32.totalorder %s49, %s63
      %p65 = scmp.eq.s32.totalorder %s18, 0
      %p66 = por %p64, %p65
      %s68 = sadd.s32 %s67, 1
      %p71 = scmp.eq.s32.totalorder %s12, 7
      %p72 = scmp.ne.s32.totalorder %s67, %s69
      %p73 = scmp.eq.s32.totalorder %s12, 0
      %p74 = por %p72, %p73
      %p75 = scmp.ne.s32.totalorder %s67, %s69
      %p76 = scmp.eq.s32.totalorder %s17, 7
      %p77 = por %p75, %p76
      %p78 = scmp.ne.s32.totalorder %s69, %s70
      %p79 = scmp.eq.s32.totalorder %s17, 0
      %p80 = por %p78, %p79
      %p81 = scmp.ne.s32.totalorder %s69, %s70
      %p82 = scmp.eq.s32.totalorder %s18, 7
      %p83 = por %p81, %p82
      %p85 = scmp.ne.s32.totalorder %s70, %s84
      %p86 = scmp.eq.s32.totalorder %s18, 0
      %p87 = por %p85, %p86
      %s89 = sadd.s32 %s88, 1
      %p92 = scmp.eq.s32.totalorder %s12, 7
      %p93 = scmp.ne.s32.totalorder %s88, %s90
      %p94 = scmp.eq.s32.totalorder %s12, 0
      %p95 = por %p93, %p94
      %p96 = scmp.ne.s32.totalorder %s88, %s90
      %p97 = scmp.eq.s32.totalorder %s17, 7
      %p98 = por %p96, %p97
      %p99 = scmp.ne.s32.totalorder %s90, %s91
      %p100 = scmp.eq.s32.totalorder %s17, 0
      %p101 = por %p99, %p100
      %p102 = scmp.ne.s32.totalorder %s90, %s91
      %p103 = scmp.eq.s32.totalorder %s18, 7
      %p104 = por %p102, %p103
      %p106 = scmp.ne.s32.totalorder %s91, %s105
      %p107 = scmp.eq.s32.totalorder %s18, 0
      %p108 = por %p106, %p107
      %s110 = sadd.s32 %s109, 1
      %p113 = scmp.eq.s32.totalorder %s12, 7
      %p114 = scmp.ne.s32.totalorder %s109, %s111
      %p115 = scmp.eq.s32.totalorder %s12, 0
      %p116 = por %p114, %p115
      %p117 = scmp.ne.s32.totalorder %s109, %s111
      %p118 = scmp.eq.s32.totalorder %s17, 7
      %p119 = por %p117, %p118
      %p120 = scmp.ne.s32.totalorder %s111, %s112
      %p121 = scmp.eq.s32.totalorder %s17, 0
      %p122 = por %p120, %p121
      %p123 = scmp.ne.s32.totalorder %s111, %s112
      %p124 = scmp.eq.s32.totalorder %s18, 7
      %p125 = por %p123, %p124
      %p127 = scmp.ne.s32.totalorder %s112, %s126
      %p128 = scmp.eq.s32.totalorder %s18, 0
      %p129 = por %p127, %p128
      %p130 = scmp.le.s32.totalorder 1, %s12
      %p131 = scmp.lt.s32.totalorder %s12, 9
      %p132 = pnand %p130, %p131
      %p133 = pneg %p132
      // Predicated region
      $region9: #{forward.2} parent=5 // pred_check
        _
      $region10: #{forward.2} parent=5 // pred_check_branch
        %135 = sbr.rel (%p132) target = $region12
      $region11: #{forward.2} parent=5 // pred_region
        %s136 = ssub.s32 %s12, 1
        // Predicated region
        $region13: #{forward.2} parent=11 // pred_check
          %p137 = pneg %p59
        $region14: #{forward.2} parent=11 // pred_check_branch
          %139 = sbr.rel (%p137) target = $region16
        $region15: #{forward.2} parent=11 // pred_region
          %s141 = ssub.s32 32768, 32768
          %142 = vsyncadd [#allocation3], %s141
          %s143 = sshll.u32 [#allocation2], 4
          %s144 = int_to_ptr.vmem [resolvable:$true] %s143
          %149 = dma.hbm_to_vmem [thread:$0]  %s1, 32768, %s144, [#allocation3], 512, 512, 32
        $region16: #{forward.2} parent=11 // pred_fallthru
          _
        // Predicated region
        $region17: #{forward.2} parent=11 // pred_check
          %p150 = pneg %p80
        $region18: #{forward.2} parent=11 // pred_check_branch
          %152 = sbr.rel (%p150) target = $region20
        $region19: #{forward.2} parent=11 // pred_region
          _
        $region20: #{forward.2} parent=11 // pred_fallthru
          _
      $region12: #{forward.2} parent=5 // pred_fallthru
        _
      %p153 = scmp.lt.s32.totalorder %s12, 8
      // Predicated region
      $region21: #{forward.2} parent=5 // pred_check
        %p154 = pneg %p153
      $region22: #{forward.2} parent=5 // pred_check_branch
        %156 = sbr.rel (%p154) target = $region24
      $region23: #{forward.2} parent=5 // pred_region
        // Predicated region
        $region25: #{forward.2} parent=23 // pred_check
          %p157 = pneg %p32
        $region26: #{forward.2} parent=23 // pred_check_branch
          %159 = sbr.rel (%p157) target = $region28
        $region27: #{forward.2} parent=23 // pred_region
          %p160 = scmp.lt.s32.totalorder %s12, 7
          %s161 = scalar_select %p160, %s12, 7
          %s162 = smul.addr %s161, 8
          %s163 = scalar_lea.vmem %s0, %s162
        $region28: #{forward.2} parent=23 // pred_fallthru
          _
      $region24: #{forward.2} parent=5 // pred_fallthru
        _
      %p164 = scmp.le.s32.totalorder 1, %s12
      %p165 = scmp.lt.s32.totalorder %s12, 9
      %p166 = pnand %p164, %p165
      %p167 = pneg %p166
      // Predicated region
      $region29: #{forward.2} parent=5 // pred_check
        _
      $region30: #{forward.2} parent=5 // pred_check_branch
        %169 = sbr.rel (%p166) target = $region32
      $region31: #{forward.2} parent=5 // pred_region
        %s170 = ssub.s32 %s12, 1
        // Predicated region
        $region33: #{forward.2} parent=31 // pred_check
          %p171 = pneg %p59
        $region34: #{forward.2} parent=31 // pred_check_branch
          %173 = sbr.rel (%p171) target = $region36
        $region35: #{forward.2} parent=31 // pred_region
          %174 = dma.done [#allocation3], 32768
        $region36: #{forward.2} parent=31 // pred_fallthru
          _
        %p175 = scmp.lt.s32.totalorder %s17, 7
        %s176 = scalar_select %p175, %s17, 7
        %s177 = smul.addr %s176, 8
        %s178 = scalar_lea.vmem %s0, %s177
        %p179 = pneg %p38
        %p180 = pneg %p35
        %p181 = pneg %p59
        %p182 = pneg %p56
        %p183 = pneg %p80
        %p184 = pneg %p77
        %p185 = pneg %p101
        %p186 = pneg %p98
        %p187 = pneg %p122
        %p188 = pneg %p119
        %p189 = scmp.lt.s32.totalorder %s17, 7
        %s190 = scalar_select %p189, %s17, 7
        %s191 = smul.addr %s190, 8
        %s192 = scalar_lea.vmem %s0, %s191
        %p193 = scmp.eq.s32.totalorder %s17, 0
        // Predicated region
        $region37: #{forward.2} parent=31 // pred_check
          %p194 = pneg %p193
        $region38: #{forward.2} parent=31 // pred_check_branch
          %196 = sbr.rel (%p194) target = $region40
        $region39: #{forward.2} parent=31 // pred_region
          %197 = vst [vmem:[%s3] sm:$0xff] 0.0
          %198 = vst [vmem:[%s3 + $0x8] sm:$0xff] 0.0
          %199 = vst [vmem:[%s4] sm:$0xff] 0.0
          %200 = vst [vmem:[%s4 + $0x8] sm:$0xff] 0.0
        $region40: #{forward.2} parent=31 // pred_fallthru
          _
        %v201 = vld [vmem:[%s192] sm:$0xff]
        %v202 = vld [vmem:[%s3] sm:$0xff]
        %v203 = vld [vmem:[%s4] sm:$0xff]
        %v204 = vld [vmem:[#allocation2] sm:$0xff]
        %v205 = vld [vmem:[#allocation2 + $0x8] sm:$0xff]
        %v206 = vld [vmem:[#allocation2 + $0x10] sm:$0xff]
        %v207 = vld [vmem:[#allocation2 + $0x18] sm:$0xff]
        %v208 = vld [vmem:[#allocation2 + $0x20] sm:$0xff]
        %v209 = vld [vmem:[#allocation2 + $0x28] sm:$0xff]
        %v210 = vld [vmem:[#allocation2 + $0x30] sm:$0xff]
        %v211 = vld [vmem:[#allocation2 + $0x38] sm:$0xff]
        %v212 = vld [vmem:[#allocation2 + $0x40] sm:$0xff]
        %v213 = vld [vmem:[#allocation2 + $0x48] sm:$0xff]
        %v214 = vld [vmem:[#allocation2 + $0x50] sm:$0xff]
        %v215 = vld [vmem:[#allocation2 + $0x58] sm:$0xff]
        %v216 = vld [vmem:[#allocation2 + $0x60] sm:$0xff]
        %v217 = vld [vmem:[#allocation2 + $0x68] sm:$0xff]
        %v218 = vld [vmem:[#allocation2 + $0x70] sm:$0xff]
        %v219 = vld [vmem:[#allocation2 + $0x78] sm:$0xff]
        %v220 = vld [vmem:[#allocation2 + $0x80] sm:$0xff]
        %v221 = vld [vmem:[#allocation2 + $0x88] sm:$0xff]
        %v222 = vld [vmem:[#allocation2 + $0x90] sm:$0xff]
        %v223 = vld [vmem:[#allocation2 + $0x98] sm:$0xff]
        %v224 = vld [vmem:[#allocation2 + $0xa0] sm:$0xff]
        %v225 = vld [vmem:[#allocation2 + $0xa8] sm:$0xff]
        %v226 = vld [vmem:[#allocation2 + $0xb0] sm:$0xff]
        %v227 = vld [vmem:[#allocation2 + $0xb8] sm:$0xff]
        %v228 = vld [vmem:[#allocation2 + $0xc0] sm:$0xff]
        %v229 = vld [vmem:[#allocation2 + $0xc8] sm:$0xff]
        %v230 = vld [vmem:[#allocation2 + $0xd0] sm:$0xff]
        %v231 = vld [vmem:[#allocation2 + $0xd8] sm:$0xff]
        %v232 = vld [vmem:[#allocation2 + $0xe0] sm:$0xff]
        %v233 = vld [vmem:[#allocation2 + $0xe8] sm:$0xff]
        %v234 = vld [vmem:[#allocation2 + $0xf0] sm:$0xff]
        %v235 = vld [vmem:[#allocation2 + $0xf8] sm:$0xff]
        %v236 = vld [vmem:[#allocation2 + $0x100] sm:$0xff]
        %v237 = vld [vmem:[#allocation2 + $0x108] sm:$0xff]
        %v238 = vld [vmem:[#allocation2 + $0x110] sm:$0xff]
        %v239 = vld [vmem:[#allocation2 + $0x118] sm:$0xff]
        %v240 = vld [vmem:[#allocation2 + $0x120] sm:$0xff]
        %v241 = vld [vmem:[#allocation2 + $0x128] sm:$0xff]
        %v242 = vld [vmem:[#allocation2 + $0x130] sm:$0xff]
        %v243 = vld [vmem:[#allocation2 + $0x138] sm:$0xff]
        %v244 = vld [vmem:[#allocation2 + $0x140] sm:$0xff]
        %v245 = vld [vmem:[#allocation2 + $0x148] sm:$0xff]
        %v246 = vld [vmem:[#allocation2 + $0x150] sm:$0xff]
        %v247 = vld [vmem:[#allocation2 + $0x158] sm:$0xff]
        %v248 = vld [vmem:[#allocation2 + $0x160] sm:$0xff]
        %v249 = vld [vmem:[#allocation2 + $0x168] sm:$0xff]
        %v250 = vld [vmem:[#allocation2 + $0x170] sm:$0xff]
        %v251 = vld [vmem:[#allocation2 + $0x178] sm:$0xff]
        %v252 = vld [vmem:[#allocation2 + $0x180] sm:$0xff]
        %v253 = vld [vmem:[#allocation2 + $0x188] sm:$0xff]
        %v254 = vld [vmem:[#allocation2 + $0x190] sm:$0xff]
        %v255 = vld [vmem:[#allocation2 + $0x198] sm:$0xff]
        %v256 = vld [vmem:[#allocation2 + $0x1a0] sm:$0xff]
        %v257 = vld [vmem:[#allocation2 + $0x1a8] sm:$0xff]
        %v258 = vld [vmem:[#allocation2 + $0x1b0] sm:$0xff]
        %v259 = vld [vmem:[#allocation2 + $0x1b8] sm:$0xff]
        %v260 = vld [vmem:[#allocation2 + $0x1c0] sm:$0xff]
        %v261 = vld [vmem:[#allocation2 + $0x1c8] sm:$0xff]
        %v262 = vld [vmem:[#allocation2 + $0x1d0] sm:$0xff]
        %v263 = vld [vmem:[#allocation2 + $0x1d8] sm:$0xff]
        %v264 = vld [vmem:[#allocation2 + $0x1e0] sm:$0xff]
        %v265 = vld [vmem:[#allocation2 + $0x1e8] sm:$0xff]
        %v266 = vld [vmem:[#allocation2 + $0x1f0] sm:$0xff]
        %v267 = vld [vmem:[#allocation2 + $0x1f8] sm:$0xff]
        %v268 = vld [vmem:[#allocation2 + $0x200] sm:$0xff]
        %v269 = vld [vmem:[#allocation2 + $0x208] sm:$0xff]
        %v270 = vld [vmem:[#allocation2 + $0x210] sm:$0xff]
        %v271 = vld [vmem:[#allocation2 + $0x218] sm:$0xff]
        %v272 = vld [vmem:[#allocation2 + $0x220] sm:$0xff]
        %v273 = vld [vmem:[#allocation2 + $0x228] sm:$0xff]
        %v274 = vld [vmem:[#allocation2 + $0x230] sm:$0xff]
        %v275 = vld [vmem:[#allocation2 + $0x238] sm:$0xff]
        %v276 = vld [vmem:[#allocation2 + $0x240] sm:$0xff]
        %v277 = vld [vmem:[#allocation2 + $0x248] sm:$0xff]
        %v278 = vld [vmem:[#allocation2 + $0x250] sm:$0xff]
        %v279 = vld [vmem:[#allocation2 + $0x258] sm:$0xff]
        %v280 = vld [vmem:[#allocation2 + $0x260] sm:$0xff]
        %v281 = vld [vmem:[#allocation2 + $0x268] sm:$0xff]
        %v282 = vld [vmem:[#allocation2 + $0x270] sm:$0xff]
        %v283 = vld [vmem:[#allocation2 + $0x278] sm:$0xff]
        %v284 = vld [vmem:[#allocation2 + $0x280] sm:$0xff]
        %v285 = vld [vmem:[#allocation2 + $0x288] sm:$0xff]
        %v286 = vld [vmem:[#allocation2 + $0x290] sm:$0xff]
        %v287 = vld [vmem:[#allocation2 + $0x298] sm:$0xff]
        %v288 = vld [vmem:[#allocation2 + $0x2a0] sm:$0xff]
        %v289 = vld [vmem:[#allocation2 + $0x2a8] sm:$0xff]
        %v290 = vld [vmem:[#allocation2 + $0x2b0] sm:$0xff]
        %v291 = vld [vmem:[#allocation2 + $0x2b8] sm:$0xff]
        %v292 = vld [vmem:[#allocation2 + $0x2c0] sm:$0xff]
        %v293 = vld [vmem:[#allocation2 + $0x2c8] sm:$0xff]
        %v294 = vld [vmem:[#allocation2 + $0x2d0] sm:$0xff]
        %v295 = vld [vmem:[#allocation2 + $0x2d8] sm:$0xff]
        %v296 = vld [vmem:[#allocation2 + $0x2e0] sm:$0xff]
        %v297 = vld [vmem:[#allocation2 + $0x2e8] sm:$0xff]
        %v298 = vld [vmem:[#allocation2 + $0x2f0] sm:$0xff]
        %v299 = vld [vmem:[#allocation2 + $0x2f8] sm:$0xff]
        %v300 = vld [vmem:[#allocation2 + $0x300] sm:$0xff]
        %v301 = vld [vmem:[#allocation2 + $0x308] sm:$0xff]
        %v302 = vld [vmem:[#allocation2 + $0x310] sm:$0xff]
        %v303 = vld [vmem:[#allocation2 + $0x318] sm:$0xff]
        %v304 = vld [vmem:[#allocation2 + $0x320] sm:$0xff]
        %v305 = vld [vmem:[#allocation2 + $0x328] sm:$0xff]
        %v306 = vld [vmem:[#allocation2 + $0x330] sm:$0xff]
        %v307 = vld [vmem:[#allocation2 + $0x338] sm:$0xff]
        %v308 = vld [vmem:[#allocation2 + $0x340] sm:$0xff]
        %v309 = vld [vmem:[#allocation2 + $0x348] sm:$0xff]
        %v310 = vld [vmem:[#allocation2 + $0x350] sm:$0xff]
        %v311 = vld [vmem:[#allocation2 + $0x358] sm:$0xff]
        %v312 = vld [vmem:[#allocation2 + $0x360] sm:$0xff]
        %v313 = vld [vmem:[#allocation2 + $0x368] sm:$0xff]
        %v314 = vld [vmem:[#allocation2 + $0x370] sm:$0xff]
        %v315 = vld [vmem:[#allocation2 + $0x378] sm:$0xff]
        %v316 = vld [vmem:[#allocation2 + $0x380] sm:$0xff]
        %v317 = vld [vmem:[#allocation2 + $0x388] sm:$0xff]
        %v318 = vld [vmem:[#allocation2 + $0x390] sm:$0xff]
        %v319 = vld [vmem:[#allocation2 + $0x398] sm:$0xff]
        %v320 = vld [vmem:[#allocation2 + $0x3a0] sm:$0xff]
        %v321 = vld [vmem:[#allocation2 + $0x3a8] sm:$0xff]
        %v322 = vld [vmem:[#allocation2 + $0x3b0] sm:$0xff]
        %v323 = vld [vmem:[#allocation2 + $0x3b8] sm:$0xff]
        %v324 = vld [vmem:[#allocation2 + $0x3c0] sm:$0xff]
        %v325 = vld [vmem:[#allocation2 + $0x3c8] sm:$0xff]
        %v326 = vld [vmem:[#allocation2 + $0x3d0] sm:$0xff]
        %v327 = vld [vmem:[#allocation2 + $0x3d8] sm:$0xff]
        %v328 = vld [vmem:[#allocation2 + $0x3e0] sm:$0xff]
        %v329 = vld [vmem:[#allocation2 + $0x3e8] sm:$0xff]
        %v330 = vld [vmem:[#allocation2 + $0x3f0] sm:$0xff]
        %v331 = vld [vmem:[#allocation2 + $0x3f8] sm:$0xff]
        %v332 = vld [vmem:[%s2] sm:$0xf]
        %v334 = vlaneseq
        %v335 = vshrl.u32 %v334, 7
        %v336 = vsub.s32 0, %v335
        %v337 = vrot.slane %v332, %v336
        %v338 = vlaneseq
        %v339 = vshrl.u32 %v338, 7
        %v340 = vsub.s32 1, %v339
        %v341 = vrot.slane %v332, %v340
        %v342 = vlaneseq
        %v343 = vshrl.u32 %v342, 7
        %v344 = vsub.s32 2, %v343
        %v345 = vrot.slane %v332, %v344
        %v346 = vlaneseq
        %v347 = vshrl.u32 %v346, 7
        %v348 = vsub.s32 3, %v347
        %v349 = vrot.slane %v332, %v348
        %354 = vmatprep.subr.mxu0 %v205
        %355 = vmatpush1.msra.mxu0 %v204
        %356 = vmatprep.subr.mxu0 %v209
        %357 = vmatpush1.msra.mxu0 %v208
        %358 = vmatprep.subr.mxu0 %v213
        %359 = vmatpush1.msra.mxu0 %v212
        %360 = vmatprep.subr.mxu0 %v217
        %361 = vmatpush1.msra.mxu0 %v216
        %362 = vmatprep.subr.mxu0 %v221
        %363 = vmatpush1.msra.mxu0 %v220
        %364 = vmatprep.subr.mxu0 %v225
        %365 = vmatpush1.msra.mxu0 %v224
        %366 = vmatprep.subr.mxu0 %v229
        %367 = vmatpush1.msra.mxu0 %v228
        %368 = vmatprep.subr.mxu0 %v233
        %369 = vmatpush1.msra.mxu0 %v232
        %370 = vmatprep.subr.mxu0 %v237
        %371 = vmatpush1.msra.mxu0 %v236
        %372 = vmatprep.subr.mxu0 %v241
        %373 = vmatpush1.msra.mxu0 %v240
        %374 = vmatprep.subr.mxu0 %v245
        %375 = vmatpush1.msra.mxu0 %v244
        %376 = vmatprep.subr.mxu0 %v249
        %377 = vmatpush1.msra.mxu0 %v248
        %378 = vmatprep.subr.mxu0 %v253
        %379 = vmatpush1.msra.mxu0 %v252
        %380 = vmatprep.subr.mxu0 %v257
        %381 = vmatpush1.msra.mxu0 %v256
        %382 = vmatprep.subr.mxu0 %v261
        %383 = vmatpush1.msra.mxu0 %v260
        %384 = vmatprep.subr.mxu0 %v265
        %385 = vmatpush1.msra.mxu0 %v264
        %386 = vmatprep.subr.mxu0 %v269
        %387 = vmatpush1.msra.mxu0 %v268
        %388 = vmatprep.subr.mxu0 %v273
        %389 = vmatpush1.msra.mxu0 %v272
        %390 = vmatprep.subr.mxu0 %v277
        %391 = vmatpush1.msra.mxu0 %v276
        %392 = vmatprep.subr.mxu0 %v281
        %393 = vmatpush1.msra.mxu0 %v280
        %394 = vmatprep.subr.mxu0 %v285
        %395 = vmatpush1.msra.mxu0 %v284
        %396 = vmatprep.subr.mxu0 %v289
        %397 = vmatpush1.msra.mxu0 %v288
        %398 = vmatprep.subr.mxu0 %v293
        %399 = vmatpush1.msra.mxu0 %v292
        %400 = vmatprep.subr.mxu0 %v297
        %401 = vmatpush1.msra.mxu0 %v296
        %402 = vmatprep.subr.mxu0 %v301
        %403 = vmatpush1.msra.mxu0 %v300
        %404 = vmatprep.subr.mxu0 %v305
        %405 = vmatpush1.msra.mxu0 %v304
        %406 = vmatprep.subr.mxu0 %v309
        %407 = vmatpush1.msra.mxu0 %v308
        %408 = vmatprep.subr.mxu0 %v313
        %409 = vmatpush1.msra.mxu0 %v312
        %410 = vmatprep.subr.mxu0 %v317
        %411 = vmatpush1.msra.mxu0 %v316
        %412 = vmatprep.subr.mxu0 %v321
        %413 = vmatpush1.msra.mxu0 %v320
        %414 = vmatprep.subr.mxu0 %v325
        %415 = vmatpush1.msra.mxu0 %v324
        %416 = vmatprep.subr.mxu0 %v329
        %417 = vmatpush1.msra.mxu0 %v328
        %418 = vmatprep.mubr.f32.mxu0 %v202
        %419 = vmatmul.mubr.f32.gmra.mrb[0].mxu0 %v201
        %v420 = vpop.f32.mrb[0].mxu0
        %v421 = vadd.f32 %v337, %v420
        %v422 = vpop.f32.mrb[0].mxu0
        %v423 = vadd.f32 %v341, %v422
        %424 = vdwg.mxu0
        %425 = vmatprep.subr.mxu0 %v207
        %426 = vmatpush1.msra.mxu0 %v206
        %427 = vmatprep.subr.mxu0 %v211
        %428 = vmatpush1.msra.mxu0 %v210
        %429 = vmatprep.subr.mxu0 %v215
        %430 = vmatpush1.msra.mxu0 %v214
        %431 = vmatprep.subr.mxu0 %v219
        %432 = vmatpush1.msra.mxu0 %v218
        %433 = vmatprep.subr.mxu0 %v223
        %434 = vmatpush1.msra.mxu0 %v222
        %435 = vmatprep.subr.mxu0 %v227
        %436 = vmatpush1.msra.mxu0 %v226
        %437 = vmatprep.subr.mxu0 %v231
        %438 = vmatpush1.msra.mxu0 %v230
        %439 = vmatprep.subr.mxu0 %v235
        %440 = vmatpush1.msra.mxu0 %v234
        %441 = vmatprep.subr.mxu0 %v239
        %442 = vmatpush1.msra.mxu0 %v238
        %443 = vmatprep.subr.mxu0 %v243
        %444 = vmatpush1.msra.mxu0 %v242
        %445 = vmatprep.subr.mxu0 %v247
        %446 = vmatpush1.msra.mxu0 %v246
        %447 = vmatprep.subr.mxu0 %v251
        %448 = vmatpush1.msra.mxu0 %v250
        %449 = vmatprep.subr.mxu0 %v255
        %450 = vmatpush1.msra.mxu0 %v254
        %451 = vmatprep.subr.mxu0 %v259
        %452 = vmatpush1.msra.mxu0 %v258
        %453 = vmatprep.subr.mxu0 %v263
        %454 = vmatpush1.msra.mxu0 %v262
        %455 = vmatprep.subr.mxu0 %v267
        %456 = vmatpush1.msra.mxu0 %v266
        %457 = vmatprep.subr.mxu0 %v271
        %458 = vmatpush1.msra.mxu0 %v270
        %459 = vmatprep.subr.mxu0 %v275
        %460 = vmatpush1.msra.mxu0 %v274
        %461 = vmatprep.subr.mxu0 %v279
        %462 = vmatpush1.msra.mxu0 %v278
        %463 = vmatprep.subr.mxu0 %v283
        %464 = vmatpush1.msra.mxu0 %v282
        %465 = vmatprep.subr.mxu0 %v287
        %466 = vmatpush1.msra.mxu0 %v286
        %467 = vmatprep.subr.mxu0 %v291
        %468 = vmatpush1.msra.mxu0 %v290
        %469 = vmatprep.subr.mxu0 %v295
        %470 = vmatpush1.msra.mxu0 %v294
        %471 = vmatprep.subr.mxu0 %v299
        %472 = vmatpush1.msra.mxu0 %v298
        %473 = vmatprep.subr.mxu0 %v303
        %474 = vmatpush1.msra.mxu0 %v302
        %475 = vmatprep.subr.mxu0 %v307
        %476 = vmatpush1.msra.mxu0 %v306
        %477 = vmatprep.subr.mxu0 %v311
        %478 = vmatpush1.msra.mxu0 %v310
        %479 = vmatprep.subr.mxu0 %v315
        %480 = vmatpush1.msra.mxu0 %v314
        %481 = vmatprep.subr.mxu0 %v319
        %482 = vmatpush1.msra.mxu0 %v318
        %483 = vmatprep.subr.mxu0 %v323
        %484 = vmatpush1.msra.mxu0 %v322
        %485 = vmatprep.subr.mxu0 %v327
        %486 = vmatpush1.msra.mxu0 %v326
        %487 = vmatprep.subr.mxu0 %v331
        %488 = vmatpush1.msra.mxu0 %v330
        %489 = vmatprep.mubr.f32.mxu0 %v202
        %490 = vmatmul.mubr.f32.gmra.mrb[0].mxu0 %v201
        %v491 = vpop.f32.mrb[0].mxu0
        %v492 = vadd.f32 %v345, %v491
        %v493 = vpop.f32.mrb[0].mxu0
        %v494 = vadd.f32 %v349, %v493
        %495 = vdwg.mxu0
        %v496 = vxor.u32 %v421, 2147483648
        %v497 = vmul.f32 %v496, 1.442695
        %v498 = vpow.pop %v497
        %v499 = vadd.f32 %v498, 1.0
        %v500 = vrcp.pop %v499
        %v501 = vmul.f32 1.0, %v500
        %v502 = vxor.u32 %v423, 2147483648
        %v503 = vmul.f32 %v502, 1.442695
        %v504 = vpow.pop %v503
        %v505 = vadd.f32 %v504, 1.0
        %v506 = vrcp.pop %v505
        %v507 = vmul.f32 1.0, %v506
        %v508 = vtanh.pop %v492
        %v509 = vxor.u32 %v494, 2147483648
        %v510 = vmul.f32 %v509, 1.442695
        %v511 = vpow.pop %v510
        %v512 = vadd.f32 %v511, 1.0
        %v513 = vrcp.pop %v512
        %v514 = vmul.f32 1.0, %v513
        %v515 = vmul.f32 %v507, %v203
        %v516 = vmul.f32 %v501, %v508
        %v517 = vadd.f32 %v515, %v516
        %v518 = vtanh.pop %v517
        %v519 = vmul.f32 %v514, %v518
        %520 = vst [vmem:[%s3] sm:$0xff] %v519
        %521 = vst [vmem:[%s4] sm:$0xff] %v517
        %s522 = scalar_lea.vmem %s3, 8
        %v523 = vld [vmem:[%s522] sm:$0xff]
        %s524 = scalar_lea.vmem %s4, 8
        %v525 = vld [vmem:[%s524] sm:$0xff]
        %s526 = scalar_lea.vmem [#allocation2], 1024
        %v527 = vld [vmem:[%s526] sm:$0xff]
        %v528 = vld [vmem:[%s526 + $0x8] sm:$0xff]
        %v529 = vld [vmem:[%s526 + $0x10] sm:$0xff]
        %v530 = vld [vmem:[%s526 + $0x18] sm:$0xff]
        %v531 = vld [vmem:[%s526 + $0x20] sm:$0xff]
        %v532 = vld [vmem:[%s526 + $0x28] sm:$0xff]
        %v533 = vld [vmem:[%s526 + $0x30] sm:$0xff]
        %v534 = vld [vmem:[%s526 + $0x38] sm:$0xff]
        %v535 = vld [vmem:[%s526 + $0x40] sm:$0xff]
        %v536 = vld [vmem:[%s526 + $0x48] sm:$0xff]
        %v537 = vld [vmem:[%s526 + $0x50] sm:$0xff]
        %v538 = vld [vmem:[%s526 + $0x58] sm:$0xff]
        %v539 = vld [vmem:[%s526 + $0x60] sm:$0xff]
        %v540 = vld [vmem:[%s526 + $0x68] sm:$0xff]
        %v541 = vld [vmem:[%s526 + $0x70] sm:$0xff]
        %v542 = vld [vmem:[%s526 + $0x78] sm:$0xff]
        %v543 = vld [vmem:[%s526 + $0x80] sm:$0xff]
        %v544 = vld [vmem:[%s526 + $0x88] sm:$0xff]
        %v545 = vld [vmem:[%s526 + $0x90] sm:$0xff]
        %v546 = vld [vmem:[%s526 + $0x98] sm:$0xff]
        %v547 = vld [vmem:[%s526 + $0xa0] sm:$0xff]
        %v548 = vld [vmem:[%s526 + $0xa8] sm:$0xff]
        %v549 = vld [vmem:[%s526 + $0xb0] sm:$0xff]
        %v550 = vld [vmem:[%s526 + $0xb8] sm:$0xff]
        %v551 = vld [vmem:[%s526 + $0xc0] sm:$0xff]
        %v552 = vld [vmem:[%s526 + $0xc8] sm:$0xff]
        %v553 = vld [vmem:[%s526 + $0xd0] sm:$0xff]
        %v554 = vld [vmem:[%s526 + $0xd8] sm:$0xff]
        %v555 = vld [vmem:[%s526 + $0xe0] sm:$0xff]
        %v556 = vld [vmem:[%s526 + $0xe8] sm:$0xff]
        %v557 = vld [vmem:[%s526 + $0xf0] sm:$0xff]
        %v558 = vld [vmem:[%s526 + $0xf8] sm:$0xff]
        %v559 = vld [vmem:[%s526 + $0x100] sm:$0xff]
        %v560 = vld [vmem:[%s526 + $0x108] sm:$0xff]
        %v561 = vld [vmem:[%s526 + $0x110] sm:$0xff]
        %v562 = vld [vmem:[%s526 + $0x118] sm:$0xff]
        %v563 = vld [vmem:[%s526 + $0x120] sm:$0xff]
        %v564 = vld [vmem:[%s526 + $0x128] sm:$0xff]
        %v565 = vld [vmem:[%s526 + $0x130] sm:$0xff]
        %v566 = vld [vmem:[%s526 + $0x138] sm:$0xff]
        %v567 = vld [vmem:[%s526 + $0x140] sm:$0xff]
        %v568 = vld [vmem:[%s526 + $0x148] sm:$0xff]
        %v569 = vld [vmem:[%s526 + $0x150] sm:$0xff]
        %v570 = vld [vmem:[%s526 + $0x158] sm:$0xff]
        %v571 = vld [vmem:[%s526 + $0x160] sm:$0xff]
        %v572 = vld [vmem:[%s526 + $0x168] sm:$0xff]
        %v573 = vld [vmem:[%s526 + $0x170] sm:$0xff]
        %v574 = vld [vmem:[%s526 + $0x178] sm:$0xff]
        %v575 = vld [vmem:[%s526 + $0x180] sm:$0xff]
        %v576 = vld [vmem:[%s526 + $0x188] sm:$0xff]
        %v577 = vld [vmem:[%s526 + $0x190] sm:$0xff]
        %v578 = vld [vmem:[%s526 + $0x198] sm:$0xff]
        %v579 = vld [vmem:[%s526 + $0x1a0] sm:$0xff]
        %v580 = vld [vmem:[%s526 + $0x1a8] sm:$0xff]
        %v581 = vld [vmem:[%s526 + $0x1b0] sm:$0xff]
        %v582 = vld [vmem:[%s526 + $0x1b8] sm:$0xff]
        %v583 = vld [vmem:[%s526 + $0x1c0] sm:$0xff]
        %v584 = vld [vmem:[%s526 + $0x1c8] sm:$0xff]
        %v585 = vld [vmem:[%s526 + $0x1d0] sm:$0xff]
        %v586 = vld [vmem:[%s526 + $0x1d8] sm:$0xff]
        %v587 = vld [vmem:[%s526 + $0x1e0] sm:$0xff]
        %v588 = vld [vmem:[%s526 + $0x1e8] sm:$0xff]
        %v589 = vld [vmem:[%s526 + $0x1f0] sm:$0xff]
        %v590 = vld [vmem:[%s526 + $0x1f8] sm:$0xff]
        %v591 = vld [vmem:[%s526 + $0x200] sm:$0xff]
        %v592 = vld [vmem:[%s526 + $0x208] sm:$0xff]
        %v593 = vld [vmem:[%s526 + $0x210] sm:$0xff]
        %v594 = vld [vmem:[%s526 + $0x218] sm:$0xff]
        %v595 = vld [vmem:[%s526 + $0x220] sm:$0xff]
        %v596 = vld [vmem:[%s526 + $0x228] sm:$0xff]
        %v597 = vld [vmem:[%s526 + $0x230] sm:$0xff]
        %v598 = vld [vmem:[%s526 + $0x238] sm:$0xff]
        %v599 = vld [vmem:[%s526 + $0x240] sm:$0xff]
        %v600 = vld [vmem:[%s526 + $0x248] sm:$0xff]
        %v601 = vld [vmem:[%s526 + $0x250] sm:$0xff]
        %v602 = vld [vmem:[%s526 + $0x258] sm:$0xff]
        %v603 = vld [vmem:[%s526 + $0x260] sm:$0xff]
        %v604 = vld [vmem:[%s526 + $0x268] sm:$0xff]
        %v605 = vld [vmem:[%s526 + $0x270] sm:$0xff]
        %v606 = vld [vmem:[%s526 + $0x278] sm:$0xff]
        %v607 = vld [vmem:[%s526 + $0x280] sm:$0xff]
        %v608 = vld [vmem:[%s526 + $0x288] sm:$0xff]
        %v609 = vld [vmem:[%s526 + $0x290] sm:$0xff]
        %v610 = vld [vmem:[%s526 + $0x298] sm:$0xff]
        %v611 = vld [vmem:[%s526 + $0x2a0] sm:$0xff]
        %v612 = vld [vmem:[%s526 + $0x2a8] sm:$0xff]
        %v613 = vld [vmem:[%s526 + $0x2b0] sm:$0xff]
        %v614 = vld [vmem:[%s526 + $0x2b8] sm:$0xff]
        %v615 = vld [vmem:[%s526 + $0x2c0] sm:$0xff]
        %v616 = vld [vmem:[%s526 + $0x2c8] sm:$0xff]
        %v617 = vld [vmem:[%s526 + $0x2d0] sm:$0xff]
        %v618 = vld [vmem:[%s526 + $0x2d8] sm:$0xff]
        %v619 = vld [vmem:[%s526 + $0x2e0] sm:$0xff]
        %v620 = vld [vmem:[%s526 + $0x2e8] sm:$0xff]
        %v621 = vld [vmem:[%s526 + $0x2f0] sm:$0xff]
        %v622 = vld [vmem:[%s526 + $0x2f8] sm:$0xff]
        %v623 = vld [vmem:[%s526 + $0x300] sm:$0xff]
        %v624 = vld [vmem:[%s526 + $0x308] sm:$0xff]
        %v625 = vld [vmem:[%s526 + $0x310] sm:$0xff]
        %v626 = vld [vmem:[%s526 + $0x318] sm:$0xff]
        %v627 = vld [vmem:[%s526 + $0x320] sm:$0xff]
        %v628 = vld [vmem:[%s526 + $0x328] sm:$0xff]
        %v629 = vld [vmem:[%s526 + $0x330] sm:$0xff]
        %v630 = vld [vmem:[%s526 + $0x338] sm:$0xff]
        %v631 = vld [vmem:[%s526 + $0x340] sm:$0xff]
        %v632 = vld [vmem:[%s526 + $0x348] sm:$0xff]
        %v633 = vld [vmem:[%s526 + $0x350] sm:$0xff]
        %v634 = vld [vmem:[%s526 + $0x358] sm:$0xff]
        %v635 = vld [vmem:[%s526 + $0x360] sm:$0xff]
        %v636 = vld [vmem:[%s526 + $0x368] sm:$0xff]
        %v637 = vld [vmem:[%s526 + $0x370] sm:$0xff]
        %v638 = vld [vmem:[%s526 + $0x378] sm:$0xff]
        %v639 = vld [vmem:[%s526 + $0x380] sm:$0xff]
        %v640 = vld [vmem:[%s526 + $0x388] sm:$0xff]
        %v641 = vld [vmem:[%s526 + $0x390] sm:$0xff]
        %v642 = vld [vmem:[%s526 + $0x398] sm:$0xff]
        %v643 = vld [vmem:[%s526 + $0x3a0] sm:$0xff]
        %v644 = vld [vmem:[%s526 + $0x3a8] sm:$0xff]
        %v645 = vld [vmem:[%s526 + $0x3b0] sm:$0xff]
        %v646 = vld [vmem:[%s526 + $0x3b8] sm:$0xff]
        %v647 = vld [vmem:[%s526 + $0x3c0] sm:$0xff]
        %v648 = vld [vmem:[%s526 + $0x3c8] sm:$0xff]
        %v649 = vld [vmem:[%s526 + $0x3d0] sm:$0xff]
        %v650 = vld [vmem:[%s526 + $0x3d8] sm:$0xff]
        %v651 = vld [vmem:[%s526 + $0x3e0] sm:$0xff]
        %v652 = vld [vmem:[%s526 + $0x3e8] sm:$0xff]
        %v653 = vld [vmem:[%s526 + $0x3f0] sm:$0xff]
        %v654 = vld [vmem:[%s526 + $0x3f8] sm:$0xff]
        %s655 = scalar_lea.vmem %s2, 4
        %v656 = vld [vmem:[%s655] sm:$0xf]
        %v658 = vlaneseq
        %v659 = vshrl.u32 %v658, 7
        %v660 = vsub.s32 0, %v659
        %v661 = vrot.slane %v656, %v660
        %v662 = vlaneseq
        %v663 = vshrl.u32 %v662, 7
        %v664 = vsub.s32 1, %v663
        %v665 = vrot.slane %v656, %v664
        %v666 = vlaneseq
        %v667 = vshrl.u32 %v666, 7
        %v668 = vsub.s32 2, %v667
        %v669 = vrot.slane %v656, %v668
        %v670 = vlaneseq
        %v671 = vshrl.u32 %v670, 7
        %v672 = vsub.s32 3, %v671
        %v673 = vrot.slane %v656, %v672
        %678 = vmatprep.subr.mxu0 %v528
        %679 = vmatpush1.msra.mxu0 %v527
        %680 = vmatprep.subr.mxu0 %v532
        %681 = vmatpush1.msra.mxu0 %v531
        %682 = vmatprep.subr.mxu0 %v536
        %683 = vmatpush1.msra.mxu0 %v535
        %684 = vmatprep.subr.mxu0 %v540
        %685 = vmatpush1.msra.mxu0 %v539
        %686 = vmatprep.subr.mxu0 %v544
        %687 = vmatpush1.msra.mxu0 %v543
        %688 = vmatprep.subr.mxu0 %v548
        %689 = vmatpush1.msra.mxu0 %v547
        %690 = vmatprep.subr.mxu0 %v552
        %691 = vmatpush1.msra.mxu0 %v551
        %692 = vmatprep.subr.mxu0 %v556
        %693 = vmatpush1.msra.mxu0 %v555
        %694 = vmatprep.subr.mxu0 %v560
        %695 = vmatpush1.msra.mxu0 %v559
        %696 = vmatprep.subr.mxu0 %v564
        %697 = vmatpush1.msra.mxu0 %v563
        %698 = vmatprep.subr.mxu0 %v568
        %699 = vmatpush1.msra.mxu0 %v567
        %700 = vmatprep.subr.mxu0 %v572
        %701 = vmatpush1.msra.mxu0 %v571
        %702 = vmatprep.subr.mxu0 %v576
        %703 = vmatpush1.msra.mxu0 %v575
        %704 = vmatprep.subr.mxu0 %v580
        %705 = vmatpush1.msra.mxu0 %v579
        %706 = vmatprep.subr.mxu0 %v584
        %707 = vmatpush1.msra.mxu0 %v583
        %708 = vmatprep.subr.mxu0 %v588
        %709 = vmatpush1.msra.mxu0 %v587
        %710 = vmatprep.subr.mxu0 %v592
        %711 = vmatpush1.msra.mxu0 %v591
        %712 = vmatprep.subr.mxu0 %v596
        %713 = vmatpush1.msra.mxu0 %v595
        %714 = vmatprep.subr.mxu0 %v600
        %715 = vmatpush1.msra.mxu0 %v599
        %716 = vmatprep.subr.mxu0 %v604
        %717 = vmatpush1.msra.mxu0 %v603
        %718 = vmatprep.subr.mxu0 %v608
        %719 = vmatpush1.msra.mxu0 %v607
        %720 = vmatprep.subr.mxu0 %v612
        %721 = vmatpush1.msra.mxu0 %v611
        %722 = vmatprep.subr.mxu0 %v616
        %723 = vmatpush1.msra.mxu0 %v615
        %724 = vmatprep.subr.mxu0 %v620
        %725 = vmatpush1.msra.mxu0 %v619
        %726 = vmatprep.subr.mxu0 %v624
        %727 = vmatpush1.msra.mxu0 %v623
        %728 = vmatprep.subr.mxu0 %v628
        %729 = vmatpush1.msra.mxu0 %v627
        %730 = vmatprep.subr.mxu0 %v632
        %731 = vmatpush1.msra.mxu0 %v631
        %732 = vmatprep.subr.mxu0 %v636
        %733 = vmatpush1.msra.mxu0 %v635
        %734 = vmatprep.subr.mxu0 %v640
        %735 = vmatpush1.msra.mxu0 %v639
        %736 = vmatprep.subr.mxu0 %v644
        %737 = vmatpush1.msra.mxu0 %v643
        %738 = vmatprep.subr.mxu0 %v648
        %739 = vmatpush1.msra.mxu0 %v647
        %740 = vmatprep.subr.mxu0 %v652
        %741 = vmatpush1.msra.mxu0 %v651
        %742 = vmatprep.mubr.f32.mxu0 %v523
        %743 = vmatmul.mubr.f32.gmra.mrb[0].mxu0 %v519
        %v744 = vpop.f32.mrb[0].mxu0
        %v745 = vadd.f32 %v661, %v744
        %v746 = vpop.f32.mrb[0].mxu0
        %v747 = vadd.f32 %v665, %v746
        %748 = vdwg.mxu0
        %749 = vmatprep.subr.mxu0 %v530
        %750 = vmatpush1.msra.mxu0 %v529
        %751 = vmatprep.subr.mxu0 %v534
        %752 = vmatpush1.msra.mxu0 %v533
        %753 = vmatprep.subr.mxu0 %v538
        %754 = vmatpush1.msra.mxu0 %v537
        %755 = vmatprep.subr.mxu0 %v542
        %756 = vmatpush1.msra.mxu0 %v541
        %757 = vmatprep.subr.mxu0 %v546
        %758 = vmatpush1.msra.mxu0 %v545
        %759 = vmatprep.subr.mxu0 %v550
        %760 = vmatpush1.msra.mxu0 %v549
        %761 = vmatprep.subr.mxu0 %v554
        %762 = vmatpush1.msra.mxu0 %v553
        %763 = vmatprep.subr.mxu0 %v558
        %764 = vmatpush1.msra.mxu0 %v557
        %765 = vmatprep.subr.mxu0 %v562
        %766 = vmatpush1.msra.mxu0 %v561
        %767 = vmatprep.subr.mxu0 %v566
        %768 = vmatpush1.msra.mxu0 %v565
        %769 = vmatprep.subr.mxu0 %v570
        %770 = vmatpush1.msra.mxu0 %v569
        %771 = vmatprep.subr.mxu0 %v574
        %772 = vmatpush1.msra.mxu0 %v573
        %773 = vmatprep.subr.mxu0 %v578
        %774 = vmatpush1.msra.mxu0 %v577
        %775 = vmatprep.subr.mxu0 %v582
        %776 = vmatpush1.msra.mxu0 %v581
        %777 = vmatprep.subr.mxu0 %v586
        %778 = vmatpush1.msra.mxu0 %v585
        %779 = vmatprep.subr.mxu0 %v590
        %780 = vmatpush1.msra.mxu0 %v589
        %781 = vmatprep.subr.mxu0 %v594
        %782 = vmatpush1.msra.mxu0 %v593
        %783 = vmatprep.subr.mxu0 %v598
        %784 = vmatpush1.msra.mxu0 %v597
        %785 = vmatprep.subr.mxu0 %v602
        %786 = vmatpush1.msra.mxu0 %v601
        %787 = vmatprep.subr.mxu0 %v606
        %788 = vmatpush1.msra.mxu0 %v605
        %789 = vmatprep.subr.mxu0 %v610
        %790 = vmatpush1.msra.mxu0 %v609
        %791 = vmatprep.subr.mxu0 %v614
        %792 = vmatpush1.msra.mxu0 %v613
        %793 = vmatprep.subr.mxu0 %v618
        %794 = vmatpush1.msra.mxu0 %v617
        %795 = vmatprep.subr.mxu0 %v622
        %796 = vmatpush1.msra.mxu0 %v621
        %797 = vmatprep.subr.mxu0 %v626
        %798 = vmatpush1.msra.mxu0 %v625
        %799 = vmatprep.subr.mxu0 %v630
        %800 = vmatpush1.msra.mxu0 %v629
        %801 = vmatprep.subr.mxu0 %v634
        %802 = vmatpush1.msra.mxu0 %v633
        %803 = vmatprep.subr.mxu0 %v638
        %804 = vmatpush1.msra.mxu0 %v637
        %805 = vmatprep.subr.mxu0 %v642
        %806 = vmatpush1.msra.mxu0 %v641
        %807 = vmatprep.subr.mxu0 %v646
        %808 = vmatpush1.msra.mxu0 %v645
        %809 = vmatprep.subr.mxu0 %v650
        %810 = vmatpush1.msra.mxu0 %v649
        %811 = vmatprep.subr.mxu0 %v654
        %812 = vmatpush1.msra.mxu0 %v653
        %813 = vmatprep.mubr.f32.mxu0 %v523
        %814 = vmatmul.mubr.f32.gmra.mrb[0].mxu0 %v519
        %v815 = vpop.f32.mrb[0].mxu0
        %v816 = vadd.f32 %v669, %v815
        %v817 = vpop.f32.mrb[0].mxu0
        %v818 = vadd.f32 %v673, %v817
        %819 = vdwg.mxu0
        %v820 = vxor.u32 %v745, 2147483648
        %v821 = vmul.f32 %v820, 1.442695
        %v822 = vpow.pop %v821
        %v823 = vadd.f32 %v822, 1.0
        %v824 = vrcp.pop %v823
        %v825 = vmul.f32 1.0, %v824
        %v826 = vxor.u32 %v747, 2147483648
        %v827 = vmul.f32 %v826, 1.442695
        %v828 = vpow.pop %v827
        %v829 = vadd.f32 %v828, 1.0
        %v830 = vrcp.pop %v829
        %v831 = vmul.f32 1.0, %v830
        %v832 = vtanh.pop %v816
        %v833 = vxor.u32 %v818, 2147483648
        %v834 = vmul.f32 %v833, 1.442695
        %v835 = vpow.pop %v834
        %v836 = vadd.f32 %v835, 1.0
        %v837 = vrcp.pop %v836
        %v838 = vmul.f32 1.0, %v837
        %v839 = vmul.f32 %v831, %v525
        %v840 = vmul.f32 %v825, %v832
        %v841 = vadd.f32 %v839, %v840
        %v842 = vtanh.pop %v841
        %v843 = vmul.f32 %v838, %v842
        %844 = vst [vmem:[%s522] sm:$0xff] %v843
        %845 = vst [vmem:[%s524] sm:$0xff] %v841
        // Predicated region
        $region41: #{forward.2} parent=31 // pred_check
          %p846 = pneg %p98
        $region42: #{forward.2} parent=31 // pred_check_branch
          %848 = sbr.rel (%p846) target = $region44
        $region43: #{forward.2} parent=31 // pred_region
          _
        $region44: #{forward.2} parent=31 // pred_fallthru
          _
        // Predicated region
        $region45: #{forward.2} parent=31 // pred_check
          %p849 = pneg %p119
        $region46: #{forward.2} parent=31 // pred_check_branch
          %851 = sbr.rel (%p849) target = $region48
        $region47: #{forward.2} parent=31 // pred_region
          _
        $region48: #{forward.2} parent=31 // pred_fallthru
          _
        // Predicated region
        $region49: #{forward.2} parent=31 // pred_check
          %p852 = pneg %p98
        $region50: #{forward.2} parent=31 // pred_check_branch
          %854 = sbr.rel (%p852) target = $region52
        $region51: #{forward.2} parent=31 // pred_region
          _
        $region52: #{forward.2} parent=31 // pred_fallthru
          _
        // Predicated region
        $region53: #{forward.2} parent=31 // pred_check
          %p855 = pneg %p119
        $region54: #{forward.2} parent=31 // pred_check_branch
          %857 = sbr.rel (%p855) target = $region56
        $region55: #{forward.2} parent=31 // pred_region
          _
        $region56: #{forward.2} parent=31 // pred_fallthru
          _
      $region32: #{forward.2} parent=5 // pred_fallthru
        _
      %p858 = scmp.le.s32.totalorder 2, %s12
      // Predicated region
      $region57: #{forward.2} parent=5 // pred_check
        %p859 = pneg %p858
      $region58: #{forward.2} parent=5 // pred_check_branch
        %861 = sbr.rel (%p859) target = $region60
      $region59: #{forward.2} parent=5 // pred_region
        %s862 = ssub.s32 %s12, 2
      $region60: #{forward.2} parent=5 // pred_fallthru
        _
    $region6: #{forward.2} parent=1 // loop_footer
      %s16 = sadd.s32 1, %s12
    $region7: #{forward.2} parent=1 // loop_footer_branch
      %11 = sbr.rel target = $region3
    $region8: #{forward.2} parent=1 // loop_exit
      _
    %863 = vsyncpa [#allocation3], 1
    %s864 = scalar_lea.sflag [#allocation3], 1
    %865 = vsyncpa %s864, 1

// kernel: forward.3
$region0: #{forward.3}
  #allocation0 [shape = 'u32[]', space=smem, size = 0x4, offset = 0x4, fixed_abs, tag = 'smem constant byte address 0x4 - core index']
  #allocation1 [shape = 'u32[144,128]{1,0:T(1,128)}', space=vmem, size = 0x12000, scoped, tag = 'internal scratch']
  #allocation2 [shape = 'f32[2,8,128]{2,1,0:T(8,128)}', space=vmem, size = 0x2000, scoped, tag = 'scratch operand']
  #allocation3 [shape = 'f32[2,8,128]{2,1,0:T(8,128)}', space=vmem, size = 0x2000, scoped, tag = 'scratch operand']
  #allocation4 [shape = 's32[8,1]{1,0:T(8,128)}', space=vmem, size = 0x1000, scoped, tag = 'scratch operand']
  #allocation5 [shape = 's32[1]{0}', space=sflag, size = 0x4, scoped, tag = 'scoped memory for forward.3']
  #allocation6 [shape = 'u8[512]{0}', space=smem, size = 0x200, scoped, tag = 'prefetched SMEM operand 0']
  %s0 = inlined_call_operand.vmem [shape: s32[7], index: 0, kind: input, shape index: {}]
  %s1 = inlined_call_operand.vmem [shape: s32[8,1], index: 1, kind: input, shape index: {}]
  %s2 = inlined_call_operand.vmem [shape: s32[7,8,1], index: 2, kind: input, shape index: {}]
  %s3 = inlined_call_operand.vmem [shape: f32[128,128], index: 3, kind: input, shape index: {}]
  %s4 = inlined_call_operand.vmem [shape: f32[2,256,512], index: 4, kind: input, shape index: {}]
  %s5 = inlined_call_operand.vmem [shape: f32[2,1,512], index: 5, kind: input, shape index: {}]
  %s6 = inlined_call_operand.vmem [shape: f32[128,128], index: 6, kind: input, shape index: {}]
  %s7 = inlined_call_operand.vmem [shape: f32[1,128], index: 7, kind: input, shape index: {}]
  %s8 = inlined_call_operand.vmem [shape: f32[2,8,128], index: 8, kind: input, shape index: {}]
  %s9 = inlined_call_operand.vmem [shape: f32[2,8,128], index: 9, kind: input, shape index: {}]
  %s10 = inlined_call_operand.vmem [shape: f32[7,8,128], index: 10, kind: output, shape index: {}]
  %s11 = sld [smem:[#allocation0]]
  $region73: #{forward.3} parent=0
    _
  %s13 = ssub.s32 1, %s11
  %s14 = scalar_select 0, %s13, %s11
  %s15 = sshll.u32 %s0, 4
  %s16 = int_to_ptr.vmem [resolvable:$true] %s15
  %18 = dma.vmem_to_smem %s16, 16, [#allocation6], [#allocation5]
  %19 = dma.done [#allocation5], 16
  %20 = sfence
  loop: start=0, step=1, limit=9
  $region2: #{forward.3} parent=0 // loop_pre_header
    _
  $region3: #{forward.3} parent=0 // loop_header
    %s22 = sphi 0, %s26
    %p23 = scmp.ge.s32.totalorder %s22, 9
    %s30 = sphi 0, %s30
    %s32 = sphi 0, %s30
    %s33 = sphi 0, %s32
    %s47 = sphi 0, %s33
    %s53 = sphi 0, %s55
    %s56 = sphi 0, %s53
    %s57 = sphi 0, %s56
    %s73 = sphi 0, %s57
    %s77 = sphi 0, %s77
    %s79 = sphi 0, %s77
    %s80 = sphi 0, %s79
    %s94 = sphi 0, %s80
    %s98 = sphi 0, %s98
    %s100 = sphi 0, %s98
    %s101 = sphi 0, %s100
    %s115 = sphi 0, %s101
    %s119 = sphi 0, %s119
    %s121 = sphi 0, %s119
    %s122 = sphi 0, %s121
    %s136 = sphi 0, %s122
    %s140 = sphi 0, %s140
    %s142 = sphi 0, %s140
    %s143 = sphi 0, %s142
    %s157 = sphi 0, %s143
    %s161 = sphi 0, %s161
    %s163 = sphi 0, %s161
    %s164 = sphi 0, %s163
    %s178 = sphi 0, %s164
    %s182 = sphi 0, %s182
    %s184 = sphi 0, %s182
    %s185 = sphi 0, %s184
    %s199 = sphi 0, %s185
    %s203 = sphi 0, %s203
    %s205 = sphi 0, %s203
    %s206 = sphi 0, %s205
    %s220 = sphi 0, %s206
    %s226 = sphi 0, %s228
    %s229 = sphi 0, %s226
    %s230 = sphi 0, %s229
    %s246 = sphi 0, %s230
  $region4: #{forward.3} parent=0 // loop_header_branch
    %25 = sbr.rel (%p23) target = $region8
  $region5: #{forward.3} parent=0 // loop_body
    %s27 = ssub.s32 %s22, 1
    %s28 = ssub.s32 %s22, 2
    %s29 = sadd.s32 %s22, 1
    %s31 = sadd.s32 %s30, 1
    %p34 = scmp.eq.s32.totalorder %s22, 6
    %p35 = scmp.ne.s32.totalorder %s30, %s32
    %p36 = scmp.eq.s32.totalorder %s22, 0
    %p37 = por %p35, %p36
    %p38 = scmp.ne.s32.totalorder %s30, %s32
    %p39 = scmp.eq.s32.totalorder %s27, 6
    %p40 = por %p38, %p39
    %p41 = scmp.ne.s32.totalorder %s32, %s33
    %p42 = scmp.eq.s32.totalorder %s27, 0
    %p43 = por %p41, %p42
    %p44 = scmp.ne.s32.totalorder %s32, %s33
    %p45 = scmp.eq.s32.totalorder %s28, 6
    %p46 = por %p44, %p45
    %p48 = scmp.ne.s32.totalorder %s33, %s47
    %p49 = scmp.eq.s32.totalorder %s28, 0
    %p50 = por %p48, %p49
    %s51 = ssub.s32 %s22, %s29
    %p52 = scmp.eq.s32.totalorder %s51, 0
    %s54 = sadd.s32 %s53, 1
    %s55 = scalar_select %p52, %s53, %s54
    %p58 = pneg %p52
    %p59 = scmp.eq.s32.totalorder %s22, 6
    %p60 = por %p58, %p59
    %p61 = scmp.ne.s32.totalorder %s53, %s56
    %p62 = scmp.eq.s32.totalorder %s22, 0
    %p63 = por %p61, %p62
    %p64 = scmp.ne.s32.totalorder %s53, %s56
    %p65 = scmp.eq.s32.totalorder %s27, 6
    %p66 = por %p64, %p65
    %p67 = scmp.ne.s32.totalorder %s56, %s57
    %p68 = scmp.eq.s32.totalorder %s27, 0
    %p69 = por %p67, %p68
    %p70 = scmp.ne.s32.totalorder %s56, %s57
    %p71 = scmp.eq.s32.totalorder %s28, 6
    %p72 = por %p70, %p71
    %p74 = scmp.ne.s32.totalorder %s57, %s73
    %p75 = scmp.eq.s32.totalorder %s28, 0
    %p76 = por %p74, %p75
    %s78 = sadd.s32 %s77, 1
    %p81 = scmp.eq.s32.totalorder %s22, 6
    %p82 = scmp.ne.s32.totalorder %s77, %s79
    %p83 = scmp.eq.s32.totalorder %s22, 0
    %p84 = por %p82, %p83
    %p85 = scmp.ne.s32.totalorder %s77, %s79
    %p86 = scmp.eq.s32.totalorder %s27, 6
    %p87 = por %p85, %p86
    %p88 = scmp.ne.s32.totalorder %s79, %s80
    %p89 = scmp.eq.s32.totalorder %s27, 0
    %p90 = por %p88, %p89
    %p91 = scmp.ne.s32.totalorder %s79, %s80
    %p92 = scmp.eq.s32.totalorder %s28, 6
    %p93 = por %p91, %p92
    %p95 = scmp.ne.s32.totalorder %s80, %s94
    %p96 = scmp.eq.s32.totalorder %s28, 0
    %p97 = por %p95, %p96
    %s99 = sadd.s32 %s98, 1
    %p102 = scmp.eq.s32.totalorder %s22, 6
    %p103 = scmp.ne.s32.totalorder %s98, %s100
    %p104 = scmp.eq.s32.totalorder %s22, 0
    %p105 = por %p103, %p104
    %p106 = scmp.ne.s32.totalorder %s98, %s100
    %p107 = scmp.eq.s32.totalorder %s27, 6
    %p108 = por %p106, %p107
    %p109 = scmp.ne.s32.totalorder %s100, %s101
    %p110 = scmp.eq.s32.totalorder %s27, 0
    %p111 = por %p109, %p110
    %p112 = scmp.ne.s32.totalorder %s100, %s101
    %p113 = scmp.eq.s32.totalorder %s28, 6
    %p114 = por %p112, %p113
    %p116 = scmp.ne.s32.totalorder %s101, %s115
    %p117 = scmp.eq.s32.totalorder %s28, 0
    %p118 = por %p116, %p117
    %s120 = sadd.s32 %s119, 1
    %p123 = scmp.eq.s32.totalorder %s22, 6
    %p124 = scmp.ne.s32.totalorder %s119, %s121
    %p125 = scmp.eq.s32.totalorder %s22, 0
    %p126 = por %p124, %p125
    %p127 = scmp.ne.s32.totalorder %s119, %s121
    %p128 = scmp.eq.s32.totalorder %s27, 6
    %p129 = por %p127, %p128
    %p130 = scmp.ne.s32.totalorder %s121, %s122
    %p131 = scmp.eq.s32.totalorder %s27, 0
    %p132 = por %p130, %p131
    %p133 = scmp.ne.s32.totalorder %s121, %s122
    %p134 = scmp.eq.s32.totalorder %s28, 6
    %p135 = por %p133, %p134
    %p137 = scmp.ne.s32.totalorder %s122, %s136
    %p138 = scmp.eq.s32.totalorder %s28, 0
    %p139 = por %p137, %p138
    %s141 = sadd.s32 %s140, 1
    %p144 = scmp.eq.s32.totalorder %s22, 6
    %p145 = scmp.ne.s32.totalorder %s140, %s142
    %p146 = scmp.eq.s32.totalorder %s22, 0
    %p147 = por %p145, %p146
    %p148 = scmp.ne.s32.totalorder %s140, %s142
    %p149 = scmp.eq.s32.totalorder %s27, 6
    %p150 = por %p148, %p149
    %p151 = scmp.ne.s32.totalorder %s142, %s143
    %p152 = scmp.eq.s32.totalorder %s27, 0
    %p153 = por %p151, %p152
    %p154 = scmp.ne.s32.totalorder %s142, %s143
    %p155 = scmp.eq.s32.totalorder %s28, 6
    %p156 = por %p154, %p155
    %p158 = scmp.ne.s32.totalorder %s143, %s157
    %p159 = scmp.eq.s32.totalorder %s28, 0
    %p160 = por %p158, %p159
    %s162 = sadd.s32 %s161, 1
    %p165 = scmp.eq.s32.totalorder %s22, 6
    %p166 = scmp.ne.s32.totalorder %s161, %s163
    %p167 = scmp.eq.s32.totalorder %s22, 0
    %p168 = por %p166, %p167
    %p169 = scmp.ne.s32.totalorder %s161, %s163
    %p170 = scmp.eq.s32.totalorder %s27, 6
    %p171 = por %p169, %p170
    %p172 = scmp.ne.s32.totalorder %s163, %s164
    %p173 = scmp.eq.s32.totalorder %s27, 0
    %p174 = por %p172, %p173
    %p175 = scmp.ne.s32.totalorder %s163, %s164
    %p176 = scmp.eq.s32.totalorder %s28, 6
    %p177 = por %p175, %p176
    %p179 = scmp.ne.s32.totalorder %s164, %s178
    %p180 = scmp.eq.s32.totalorder %s28, 0
    %p181 = por %p179, %p180
    %s183 = sadd.s32 %s182, 1
    %p186 = scmp.eq.s32.totalorder %s22, 6
    %p187 = scmp.ne.s32.totalorder %s182, %s184
    %p188 = scmp.eq.s32.totalorder %s22, 0
    %p189 = por %p187, %p188
    %p190 = scmp.ne.s32.totalorder %s182, %s184
    %p191 = scmp.eq.s32.totalorder %s27, 6
    %p192 = por %p190, %p191
    %p193 = scmp.ne.s32.totalorder %s184, %s185
    %p194 = scmp.eq.s32.totalorder %s27, 0
    %p195 = por %p193, %p194
    %p196 = scmp.ne.s32.totalorder %s184, %s185
    %p197 = scmp.eq.s32.totalorder %s28, 6
    %p198 = por %p196, %p197
    %p200 = scmp.ne.s32.totalorder %s185, %s199
    %p201 = scmp.eq.s32.totalorder %s28, 0
    %p202 = por %p200, %p201
    %s204 = sadd.s32 %s203, 1
    %p207 = scmp.eq.s32.totalorder %s22, 6
    %p208 = scmp.ne.s32.totalorder %s203, %s205
    %p209 = scmp.eq.s32.totalorder %s22, 0
    %p210 = por %p208, %p209
    %p211 = scmp.ne.s32.totalorder %s203, %s205
    %p212 = scmp.eq.s32.totalorder %s27, 6
    %p213 = por %p211, %p212
    %p214 = scmp.ne.s32.totalorder %s205, %s206
    %p215 = scmp.eq.s32.totalorder %s27, 0
    %p216 = por %p214, %p215
    %p217 = scmp.ne.s32.totalorder %s205, %s206
    %p218 = scmp.eq.s32.totalorder %s28, 6
    %p219 = por %p217, %p218
    %p221 = scmp.ne.s32.totalorder %s206, %s220
    %p222 = scmp.eq.s32.totalorder %s28, 0
    %p223 = por %p221, %p222
    %s224 = ssub.s32 %s22, %s29
    %p225 = scmp.eq.s32.totalorder %s224, 0
    %s227 = sadd.s32 %s226, 1
    %s228 = scalar_select %p225, %s226, %s227
    %p231 = pneg %p225
    %p232 = scmp.eq.s32.totalorder %s22, 6
    %p233 = por %p231, %p232
    %p234 = scmp.ne.s32.totalorder %s226, %s229
    %p235 = scmp.eq.s32.totalorder %s22, 0
    %p236 = por %p234, %p235
    %p237 = scmp.ne.s32.totalorder %s226, %s229
    %p238 = scmp.eq.s32.totalorder %s27, 6
    %p239 = por %p237, %p238
    %p240 = scmp.ne.s32.totalorder %s229, %s230
    %p241 = scmp.eq.s32.totalorder %s27, 0
    %p242 = por %p240, %p241
    %p243 = scmp.ne.s32.totalorder %s229, %s230
    %p244 = scmp.eq.s32.totalorder %s28, 6
    %p245 = por %p243, %p244
    %p247 = scmp.ne.s32.totalorder %s230, %s246
    %p248 = scmp.eq.s32.totalorder %s28, 0
    %p249 = por %p247, %p248
    %p250 = scmp.le.s32.totalorder 1, %s22
    %p251 = scmp.lt.s32.totalorder %s22, 8
    %p252 = pnand %p250, %p251
    %p253 = pneg %p252
    // Predicated region
    $region9: #{forward.3} parent=5 // pred_check
      _
    $region10: #{forward.3} parent=5 // pred_check_branch
      %255 = sbr.rel (%p252) target = $region12
    $region11: #{forward.3} parent=5 // pred_region
      %s256 = ssub.s32 %s22, 1
      // Predicated region
      $region13: #{forward.3} parent=11 // pred_check
        %p257 = pneg %p43
      $region14: #{forward.3} parent=11 // pred_check_branch
        %259 = sbr.rel (%p257) target = $region16
      $region15: #{forward.3} parent=11 // pred_region
        _
      $region16: #{forward.3} parent=11 // pred_fallthru
        _
      // Predicated region
      $region17: #{forward.3} parent=11 // pred_check
        %p260 = pneg %p90
      $region18: #{forward.3} parent=11 // pred_check_branch
        %262 = sbr.rel (%p260) target = $region20
      $region19: #{forward.3} parent=11 // pred_region
        _
      $region20: #{forward.3} parent=11 // pred_fallthru
        _
      // Predicated region
      $region21: #{forward.3} parent=11 // pred_check
        %p263 = pneg %p111
      $region22: #{forward.3} parent=11 // pred_check_branch
        %265 = sbr.rel (%p263) target = $region24
      $region23: #{forward.3} parent=11 // pred_region
        _
      $region24: #{forward.3} parent=11 // pred_fallthru
        _
      // Predicated region
      $region25: #{forward.3} parent=11 // pred_check
        %p266 = pneg %p132
      $region26: #{forward.3} parent=11 // pred_check_branch
        %268 = sbr.rel (%p266) target = $region28
      $region27: #{forward.3} parent=11 // pred_region
        _
      $region28: #{forward.3} parent=11 // pred_fallthru
        _
      // Predicated region
      $region29: #{forward.3} parent=11 // pred_check
        %p269 = pneg %p153
      $region30: #{forward.3} parent=11 // pred_check_branch
        %271 = sbr.rel (%p269) target = $region32
      $region31: #{forward.3} parent=11 // pred_region
        _
      $region32: #{forward.3} parent=11 // pred_fallthru
        _
      // Predicated region
      $region33: #{forward.3} parent=11 // pred_check
        %p272 = pneg %p174
      $region34: #{forward.3} parent=11 // pred_check_branch
        %274 = sbr.rel (%p272) target = $region36
      $region35: #{forward.3} parent=11 // pred_region
        _
      $region36: #{forward.3} parent=11 // pred_fallthru
        _
      // Predicated region
      $region37: #{forward.3} parent=11 // pred_check
        %p275 = pneg %p195
      $region38: #{forward.3} parent=11 // pred_check_branch
        %277 = sbr.rel (%p275) target = $region40
      $region39: #{forward.3} parent=11 // pred_region
        _
      $region40: #{forward.3} parent=11 // pred_fallthru
        _
      // Predicated region
      $region41: #{forward.3} parent=11 // pred_check
        %p278 = pneg %p216
      $region42: #{forward.3} parent=11 // pred_check_branch
        %280 = sbr.rel (%p278) target = $region44
      $region43: #{forward.3} parent=11 // pred_region
        _
      $region44: #{forward.3} parent=11 // pred_fallthru
        _
    $region12: #{forward.3} parent=5 // pred_fallthru
      _
    %p281 = scmp.lt.s32.totalorder %s22, 7
    // Predicated region
    $region45: #{forward.3} parent=5 // pred_check
      %p282 = pneg %p281
    $region46: #{forward.3} parent=5 // pred_check_branch
      %284 = sbr.rel (%p282) target = $region48
    $region47: #{forward.3} parent=5 // pred_region
      // Predicated region
      $region49: #{forward.3} parent=47 // pred_check
        %p285 = pneg %p63
      $region50: #{forward.3} parent=47 // pred_check_branch
        %287 = sbr.rel (%p285) target = $region52
      $region51: #{forward.3} parent=47 // pred_region
        %p288 = scmp.lt.s32.totalorder %s22, 6
        %s289 = scalar_select %p288, %s22, 6
        %s290 = smul.addr %s289, 8
        %s291 = scalar_lea.vmem %s2, %s290
      $region52: #{forward.3} parent=47 // pred_fallthru
        _
    $region48: #{forward.3} parent=5 // pred_fallthru
      _
    %p292 = scmp.le.s32.totalorder 1, %s22
    %p293 = scmp.lt.s32.totalorder %s22, 8
    %p294 = pnand %p292, %p293
    %p295 = pneg %p294
    // Predicated region
    $region53: #{forward.3} parent=5 // pred_check
      _
    $region54: #{forward.3} parent=5 // pred_check_branch
      %297 = sbr.rel (%p294) target = $region56
    $region55: #{forward.3} parent=5 // pred_region
      %s298 = ssub.s32 %s22, 1
      %p299 = pneg %p43
      %p300 = pneg %p40
      %p301 = scmp.lt.s32.totalorder %s27, 6
      %s302 = scalar_select %p301, %s27, 6
      %s303 = smul.addr %s302, 8
      %s304 = scalar_lea.vmem %s2, %s303
      %p305 = pneg %p69
      %p306 = pneg %p66
      %p307 = pneg %p90
      %p308 = pneg %p87
      %p309 = pneg %p111
      %p310 = pneg %p108
      %p311 = pneg %p132
      %p312 = pneg %p129
      %p313 = pneg %p153
      %p314 = pneg %p150
      %p315 = pneg %p174
      %p316 = pneg %p171
      %p317 = pneg %p195
      %p318 = pneg %p192
      %p319 = pneg %p216
      %p320 = pneg %p213
      %p321 = pneg %p242
      %p322 = pneg %p239
      %p323 = scmp.lt.s32.totalorder %s27, 6
      %s324 = scalar_select %p323, %s27, 6
      %s325 = smul.addr %s324, 8
      %s326 = scalar_lea.vmem %s10, %s325
      %p327 = scmp.lt.s32.totalorder %s27, 6
      %s328 = scalar_select %p327, %s27, 6
      %s329 = smul.addr %s328, 8
      %s330 = scalar_lea.vmem %s2, %s329
      %p331 = scmp.lt.s32.totalorder %s27, 6
      %s332 = scalar_select %p331, %s27, 6
      %s333 = smul.addr %s332, 8
      %s334 = scalar_lea.vmem %s10, %s333
      %p335 = scmp.eq.s32.totalorder %s27, 0
      // Predicated region
      $region57: #{forward.3} parent=55 // pred_check
        %p336 = pneg %p335
      $region58: #{forward.3} parent=55 // pred_check_branch
        %338 = sbr.rel (%p336) target = $region60
      $region59: #{forward.3} parent=55 // pred_region
        %v339 = vld [vmem:[%s8] sm:$0xff]
        %v340 = vld [vmem:[%s8 + $0x8] sm:$0xff]
        %341 = vst [vmem:[#allocation2] sm:$0xff] %v339
        %342 = vst [vmem:[#allocation2 + $0x8] sm:$0xff] %v340
        %v343 = vld [vmem:[%s9] sm:$0xff]
        %v344 = vld [vmem:[%s9 + $0x8] sm:$0xff]
        %345 = vst [vmem:[#allocation3] sm:$0xff] %v343
        %346 = vst [vmem:[#allocation3 + $0x8] sm:$0xff] %v344
        %v347 = vld [vmem:[%s1] sm:$0xff]
        %vm348 = vcmask 7168
        %349 = vst.msk [vmem:[#allocation4] sm:$0xff] %vm348, %v347
      $region60: #{forward.3} parent=55 // pred_fallthru
        _
      %v350 = vld [vmem:[#allocation4] sm:$0xff]
      %v351 = vlaneseq
      %v352 = vand.u32 %v351, 127
      %353 = vset.pattern.permute.xlu0 0
      %354 = vperm.xlu0 %353, %v350
      %v355 = vpop.permute.xlu0 %354
      %vm356 = vcmp.eq.s32.totalorder %v352, %v355
      %v357 = vsel %vm356, 1, 0
      %v358 = vcvt.s32.f32 %v357
      %v359 = vld [vmem:[%s3] sm:$0xff]
      %v360 = vld [vmem:[%s3 + $0x8] sm:$0xff]
      %v361 = vld [vmem:[%s3 + $0x10] sm:$0xff]
      %v362 = vld [vmem:[%s3 + $0x18] sm:$0xff]
      %v363 = vld [vmem:[%s3 + $0x20] sm:$0xff]
      %v364 = vld [vmem:[%s3 + $0x28] sm:$0xff]
      %v365 = vld [vmem:[%s3 + $0x30] sm:$0xff]
      %v366 = vld [vmem:[%s3 + $0x38] sm:$0xff]
      %v367 = vld [vmem:[%s3 + $0x40] sm:$0xff]
      %v368 = vld [vmem:[%s3 + $0x48] sm:$0xff]
      %v369 = vld [vmem:[%s3 + $0x50] sm:$0xff]
      %v370 = vld [vmem:[%s3 + $0x58] sm:$0xff]
      %v371 = vld [vmem:[%s3 + $0x60] sm:$0xff]
      %v372 = vld [vmem:[%s3 + $0x68] sm:$0xff]
      %v373 = vld [vmem:[%s3 + $0x70] sm:$0xff]
      %v374 = vld [vmem:[%s3 + $0x78] sm:$0xff]
      %375 = vmatprep.subr.mxu0 0.0
      %376 = vmatpush1.msra.mxu0 %v359
      %377 = vmatprep.subr.mxu0 0.0
      %378 = vmatpush1.msra.mxu0 %v360
      %379 = vmatprep.subr.mxu0 0.0
      %380 = vmatpush1.msra.mxu0 %v361
      %381 = vmatprep.subr.mxu0 0.0
      %382 = vmatpush1.msra.mxu0 %v362
      %383 = vmatprep.subr.mxu0 0.0
      %384 = vmatpush1.msra.mxu0 %v363
      %385 = vmatprep.subr.mxu0 0.0
      %386 = vmatpush1.msra.mxu0 %v364
      %387 = vmatprep.subr.mxu0 0.0
      %388 = vmatpush1.msra.mxu0 %v365
      %389 = vmatprep.subr.mxu0 0.0
      %390 = vmatpush1.msra.mxu0 %v366
      %391 = vmatprep.subr.mxu0 0.0
      %392 = vmatpush1.msra.mxu0 %v367
      %393 = vmatprep.subr.mxu0 0.0
      %394 = vmatpush1.msra.mxu0 %v368
      %395 = vmatprep.subr.mxu0 0.0
      %396 = vmatpush1.msra.mxu0 %v369
      %397 = vmatprep.subr.mxu0 0.0
      %398 = vmatpush1.msra.mxu0 %v370
      %399 = vmatprep.subr.mxu0 0.0
      %400 = vmatpush1.msra.mxu0 %v371
      %401 = vmatprep.subr.mxu0 0.0
      %402 = vmatpush1.msra.mxu0 %v372
      %403 = vmatprep.subr.mxu0 0.0
      %404 = vmatpush1.msra.mxu0 %v373
      %405 = vmatprep.subr.mxu0 0.0
      %406 = vmatpush1.msra.mxu0 %v374
      %407 = vmatprep.subr.mxu0 0.0
      %408 = vmatpush1.msra.mxu0 0.0
      %409 = vmatprep.subr.mxu0 0.0
      %410 = vmatpush1.msra.mxu0 0.0
      %411 = vmatprep.subr.mxu0 0.0
      %412 = vmatpush1.msra.mxu0 0.0
      %413 = vmatprep.subr.mxu0 0.0
      %414 = vmatpush1.msra.mxu0 0.0
      %415 = vmatprep.subr.mxu0 0.0
      %416 = vmatpush1.msra.mxu0 0.0
      %417 = vmatprep.subr.mxu0 0.0
      %418 = vmatpush1.msra.mxu0 0.0
      %419 = vmatprep.subr.mxu0 0.0
      %420 = vmatpush1.msra.mxu0 0.0
      %421 = vmatprep.subr.mxu0 0.0
      %422 = vmatpush1.msra.mxu0 0.0
      %423 = vmatprep.subr.mxu0 0.0
      %424 = vmatpush1.msra.mxu0 0.0
      %425 = vmatprep.subr.mxu0 0.0
      %426 = vmatpush1.msra.mxu0 0.0
      %427 = vmatprep.subr.mxu0 0.0
      %428 = vmatpush1.msra.mxu0 0.0
      %429 = vmatprep.subr.mxu0 0.0
      %430 = vmatpush1.msra.mxu0 0.0
      %431 = vmatprep.subr.mxu0 0.0
      %432 = vmatpush1.msra.mxu0 0.0
      %433 = vmatprep.subr.mxu0 0.0
      %434 = vmatpush1.msra.mxu0 0.0
      %435 = vmatprep.subr.mxu0 0.0
      %436 = vmatpush1.msra.mxu0 0.0
      %437 = vmatprep.subr.mxu0 0.0
      %438 = vmatpush1.msra.mxu0 0.0
      %439 = vmatprep.mubr.f32.mxu0 0.0
      %440 = vmatmul.mubr.f32.gmra.mrb[0].mxu0 %v358
      %v441 = vpop.f32.mrb[0].mxu0
      %v442 = vadd.f32 0.0, %v441
      %v443 = vpop.f32.mrb[0].mxu0
      %444 = vdwg.mxu0
      %v445 = vld [vmem:[#allocation2] sm:$0xff]
      %v446 = vld [vmem:[#allocation3] sm:$0xff]
      %v447 = vld [vmem:[%s4] sm:$0xff]
      %v448 = vld [vmem:[%s4 + $0x8] sm:$0xff]
      %v449 = vld [vmem:[%s4 + $0x10] sm:$0xff]
      %v450 = vld [vmem:[%s4 + $0x18] sm:$0xff]
      %v451 = vld [vmem:[%s4 + $0x20] sm:$0xff]
      %v452 = vld [vmem:[%s4 + $0x28] sm:$0xff]
      %v453 = vld [vmem:[%s4 + $0x30] sm:$0xff]
      %v454 = vld [vmem:[%s4 + $0x38] sm:$0xff]
      %v455 = vld [vmem:[%s4 + $0x40] sm:$0xff]
      %v456 = vld [vmem:[%s4 + $0x48] sm:$0xff]
      %v457 = vld [vmem:[%s4 + $0x50] sm:$0xff]
      %v458 = vld [vmem:[%s4 + $0x58] sm:$0xff]
      %v459 = vld [vmem:[%s4 + $0x60] sm:$0xff]
      %v460 = vld [vmem:[%s4 + $0x68] sm:$0xff]
      %v461 = vld [vmem:[%s4 + $0x70] sm:$0xff]
      %v462 = vld [vmem:[%s4 + $0x78] sm:$0xff]
      %v463 = vld [vmem:[%s4 + $0x80] sm:$0xff]
      %v464 = vld [vmem:[%s4 + $0x88] sm:$0xff]
      %v465 = vld [vmem:[%s4 + $0x90] sm:$0xff]
      %v466 = vld [vmem:[%s4 + $0x98] sm:$0xff]
      %v467 = vld [vmem:[%s4 + $0xa0] sm:$0xff]
      %v468 = vld [vmem:[%s4 + $0xa8] sm:$0xff]
      %v469 = vld [vmem:[%s4 + $0xb0] sm:$0xff]
      %v470 = vld [vmem:[%s4 + $0xb8] sm:$0xff]
      %v471 = vld [vmem:[%s4 + $0xc0] sm:$0xff]
      %v472 = vld [vmem:[%s4 + $0xc8] sm:$0xff]
      %v473 = vld [vmem:[%s4 + $0xd0] sm:$0xff]
      %v474 = vld [vmem:[%s4 + $0xd8] sm:$0xff]
      %v475 = vld [vmem:[%s4 + $0xe0] sm:$0xff]
      %v476 = vld [vmem:[%s4 + $0xe8] sm:$0xff]
      %v477 = vld [vmem:[%s4 + $0xf0] sm:$0xff]
      %v478 = vld [vmem:[%s4 + $0xf8] sm:$0xff]
      %v479 = vld [vmem:[%s4 + $0x100] sm:$0xff]
      %v480 = vld [vmem:[%s4 + $0x108] sm:$0xff]
      %v481 = vld [vmem:[%s4 + $0x110] sm:$0xff]
      %v482 = vld [vmem:[%s4 + $0x118] sm:$0xff]
      %v483 = vld [vmem:[%s4 + $0x120] sm:$0xff]
      %v484 = vld [vmem:[%s4 + $0x128] sm:$0xff]
      %v485 = vld [vmem:[%s4 + $0x130] sm:$0xff]
      %v486 = vld [vmem:[%s4 + $0x138] sm:$0xff]
      %v487 = vld [vmem:[%s4 + $0x140] sm:$0xff]
      %v488 = vld [vmem:[%s4 + $0x148] sm:$0xff]
      %v489 = vld [vmem:[%s4 + $0x150] sm:$0xff]
      %v490 = vld [vmem:[%s4 + $0x158] sm:$0xff]
      %v491 = vld [vmem:[%s4 + $0x160] sm:$0xff]
      %v492 = vld [vmem:[%s4 + $0x168] sm:$0xff]
      %v493 = vld [vmem:[%s4 + $0x170] sm:$0xff]
      %v494 = vld [vmem:[%s4 + $0x178] sm:$0xff]
      %v495 = vld [vmem:[%s4 + $0x180] sm:$0xff]
      %v496 = vld [vmem:[%s4 + $0x188] sm:$0xff]
      %v497 = vld [vmem:[%s4 + $0x190] sm:$0xff]
      %v498 = vld [vmem:[%s4 + $0x198] sm:$0xff]
      %v499 = vld [vmem:[%s4 + $0x1a0] sm:$0xff]
      %v500 = vld [vmem:[%s4 + $0x1a8] sm:$0xff]
      %v501 = vld [vmem:[%s4 + $0x1b0] sm:$0xff]
      %v502 = vld [vmem:[%s4 + $0x1b8] sm:$0xff]
      %v503 = vld [vmem:[%s4 + $0x1c0] sm:$0xff]
      %v504 = vld [vmem:[%s4 + $0x1c8] sm:$0xff]
      %v505 = vld [vmem:[%s4 + $0x1d0] sm:$0xff]
      %v506 = vld [vmem:[%s4 + $0x1d8] sm:$0xff]
      %v507 = vld [vmem:[%s4 + $0x1e0] sm:$0xff]
      %v508 = vld [vmem:[%s4 + $0x1e8] sm:$0xff]
      %v509 = vld [vmem:[%s4 + $0x1f0] sm:$0xff]
      %v510 = vld [vmem:[%s4 + $0x1f8] sm:$0xff]
      %v511 = vld [vmem:[%s4 + $0x200] sm:$0xff]
      %v512 = vld [vmem:[%s4 + $0x208] sm:$0xff]
      %v513 = vld [vmem:[%s4 + $0x210] sm:$0xff]
      %v514 = vld [vmem:[%s4 + $0x218] sm:$0xff]
      %v515 = vld [vmem:[%s4 + $0x220] sm:$0xff]
      %v516 = vld [vmem:[%s4 + $0x228] sm:$0xff]
      %v517 = vld [vmem:[%s4 + $0x230] sm:$0xff]
      %v518 = vld [vmem:[%s4 + $0x238] sm:$0xff]
      %v519 = vld [vmem:[%s4 + $0x240] sm:$0xff]
      %v520 = vld [vmem:[%s4 + $0x248] sm:$0xff]
      %v521 = vld [vmem:[%s4 + $0x250] sm:$0xff]
      %v522 = vld [vmem:[%s4 + $0x258] sm:$0xff]
      %v523 = vld [vmem:[%s4 + $0x260] sm:$0xff]
      %v524 = vld [vmem:[%s4 + $0x268] sm:$0xff]
      %v525 = vld [vmem:[%s4 + $0x270] sm:$0xff]
      %v526 = vld [vmem:[%s4 + $0x278] sm:$0xff]
      %v527 = vld [vmem:[%s4 + $0x280] sm:$0xff]
      %v528 = vld [vmem:[%s4 + $0x288] sm:$0xff]
      %v529 = vld [vmem:[%s4 + $0x290] sm:$0xff]
      %v530 = vld [vmem:[%s4 + $0x298] sm:$0xff]
      %v531 = vld [vmem:[%s4 + $0x2a0] sm:$0xff]
      %v532 = vld [vmem:[%s4 + $0x2a8] sm:$0xff]
      %v533 = vld [vmem:[%s4 + $0x2b0] sm:$0xff]
      %v534 = vld [vmem:[%s4 + $0x2b8] sm:$0xff]
      %v535 = vld [vmem:[%s4 + $0x2c0] sm:$0xff]
      %v536 = vld [vmem:[%s4 + $0x2c8] sm:$0xff]
      %v537 = vld [vmem:[%s4 + $0x2d0] sm:$0xff]
      %v538 = vld [vmem:[%s4 + $0x2d8] sm:$0xff]
      %v539 = vld [vmem:[%s4 + $0x2e0] sm:$0xff]
      %v540 = vld [vmem:[%s4 + $0x2e8] sm:$0xff]
      %v541 = vld [vmem:[%s4 + $0x2f0] sm:$0xff]
      %v542 = vld [vmem:[%s4 + $0x2f8] sm:$0xff]
      %v543 = vld [vmem:[%s4 + $0x300] sm:$0xff]
      %v544 = vld [vmem:[%s4 + $0x308] sm:$0xff]
      %v545 = vld [vmem:[%s4 + $0x310] sm:$0xff]
      %v546 = vld [vmem:[%s4 + $0x318] sm:$0xff]
      %v547 = vld [vmem:[%s4 + $0x320] sm:$0xff]
      %v548 = vld [vmem:[%s4 + $0x328] sm:$0xff]
      %v549 = vld [vmem:[%s4 + $0x330] sm:$0xff]
      %v550 = vld [vmem:[%s4 + $0x338] sm:$0xff]
      %v551 = vld [vmem:[%s4 + $0x340] sm:$0xff]
      %v552 = vld [vmem:[%s4 + $0x348] sm:$0xff]
      %v553 = vld [vmem:[%s4 + $0x350] sm:$0xff]
      %v554 = vld [vmem:[%s4 + $0x358] sm:$0xff]
      %v555 = vld [vmem:[%s4 + $0x360] sm:$0xff]
      %v556 = vld [vmem:[%s4 + $0x368] sm:$0xff]
      %v557 = vld [vmem:[%s4 + $0x370] sm:$0xff]
      %v558 = vld [vmem:[%s4 + $0x378] sm:$0xff]
      %v559 = vld [vmem:[%s4 + $0x380] sm:$0xff]
      %v560 = vld [vmem:[%s4 + $0x388] sm:$0xff]
      %v561 = vld [vmem:[%s4 + $0x390] sm:$0xff]
      %v562 = vld [vmem:[%s4 + $0x398] sm:$0xff]
      %v563 = vld [vmem:[%s4 + $0x3a0] sm:$0xff]
      %v564 = vld [vmem:[%s4 + $0x3a8] sm:$0xff]
      %v565 = vld [vmem:[%s4 + $0x3b0] sm:$0xff]
      %v566 = vld [vmem:[%s4 + $0x3b8] sm:$0xff]
      %v567 = vld [vmem:[%s4 + $0x3c0] sm:$0xff]
      %v568 = vld [vmem:[%s4 + $0x3c8] sm:$0xff]
      %v569 = vld [vmem:[%s4 + $0x3d0] sm:$0xff]
      %v570 = vld [vmem:[%s4 + $0x3d8] sm:$0xff]
      %v571 = vld [vmem:[%s4 + $0x3e0] sm:$0xff]
      %v572 = vld [vmem:[%s4 + $0x3e8] sm:$0xff]
      %v573 = vld [vmem:[%s4 + $0x3f0] sm:$0xff]
      %v574 = vld [vmem:[%s4 + $0x3f8] sm:$0xff]
      %v575 = vld [vmem:[%s5] sm:$0xf]
      %v577 = vlaneseq
      %v578 = vshrl.u32 %v577, 7
      %v579 = vsub.s32 0, %v578
      %v580 = vrot.slane %v575, %v579
      %v581 = vlaneseq
      %v582 = vshrl.u32 %v581, 7
      %v583 = vsub.s32 1, %v582
      %v584 = vrot.slane %v575, %v583
      %v585 = vlaneseq
      %v586 = vshrl.u32 %v585, 7
      %v587 = vsub.s32 2, %v586
      %v588 = vrot.slane %v575, %v587
      %v589 = vlaneseq
      %v590 = vshrl.u32 %v589, 7
      %v591 = vsub.s32 3, %v590
      %v592 = vrot.slane %v575, %v591
      %597 = vmatprep.subr.mxu0 %v448
      %598 = vmatpush1.msra.mxu0 %v447
      %599 = vmatprep.subr.mxu0 %v452
      %600 = vmatpush1.msra.mxu0 %v451
      %601 = vmatprep.subr.mxu0 %v456
      %602 = vmatpush1.msra.mxu0 %v455
      %603 = vmatprep.subr.mxu0 %v460
      %604 = vmatpush1.msra.mxu0 %v459
      %605 = vmatprep.subr.mxu0 %v464
      %606 = vmatpush1.msra.mxu0 %v463
      %607 = vmatprep.subr.mxu0 %v468
      %608 = vmatpush1.msra.mxu0 %v467
      %609 = vmatprep.subr.mxu0 %v472
      %610 = vmatpush1.msra.mxu0 %v471
      %611 = vmatprep.subr.mxu0 %v476
      %612 = vmatpush1.msra.mxu0 %v475
      %613 = vmatprep.subr.mxu0 %v480
      %614 = vmatpush1.msra.mxu0 %v479
      %615 = vmatprep.subr.mxu0 %v484
      %616 = vmatpush1.msra.mxu0 %v483
      %617 = vmatprep.subr.mxu0 %v488
      %618 = vmatpush1.msra.mxu0 %v487
      %619 = vmatprep.subr.mxu0 %v492
      %620 = vmatpush1.msra.mxu0 %v491
      %621 = vmatprep.subr.mxu0 %v496
      %622 = vmatpush1.msra.mxu0 %v495
      %623 = vmatprep.subr.mxu0 %v500
      %624 = vmatpush1.msra.mxu0 %v499
      %625 = vmatprep.subr.mxu0 %v504
      %626 = vmatpush1.msra.mxu0 %v503
      %627 = vmatprep.subr.mxu0 %v508
      %628 = vmatpush1.msra.mxu0 %v507
      %629 = vmatprep.subr.mxu0 %v512
      %630 = vmatpush1.msra.mxu0 %v511
      %631 = vmatprep.subr.mxu0 %v516
      %632 = vmatpush1.msra.mxu0 %v515
      %633 = vmatprep.subr.mxu0 %v520
      %634 = vmatpush1.msra.mxu0 %v519
      %635 = vmatprep.subr.mxu0 %v524
      %636 = vmatpush1.msra.mxu0 %v523
      %637 = vmatprep.subr.mxu0 %v528
      %638 = vmatpush1.msra.mxu0 %v527
      %639 = vmatprep.subr.mxu0 %v532
      %640 = vmatpush1.msra.mxu0 %v531
      %641 = vmatprep.subr.mxu0 %v536
      %642 = vmatpush1.msra.mxu0 %v535
      %643 = vmatprep.subr.mxu0 %v540
      %644 = vmatpush1.msra.mxu0 %v539
      %645 = vmatprep.subr.mxu0 %v544
      %646 = vmatpush1.msra.mxu0 %v543
      %647 = vmatprep.subr.mxu0 %v548
      %648 = vmatpush1.msra.mxu0 %v547
      %649 = vmatprep.subr.mxu0 %v552
      %650 = vmatpush1.msra.mxu0 %v551
      %651 = vmatprep.subr.mxu0 %v556
      %652 = vmatpush1.msra.mxu0 %v555
      %653 = vmatprep.subr.mxu0 %v560
      %654 = vmatpush1.msra.mxu0 %v559
      %655 = vmatprep.subr.mxu0 %v564
      %656 = vmatpush1.msra.mxu0 %v563
      %657 = vmatprep.subr.mxu0 %v568
      %658 = vmatpush1.msra.mxu0 %v567
      %659 = vmatprep.subr.mxu0 %v572
      %660 = vmatpush1.msra.mxu0 %v571
      %661 = vmatprep.mubr.f32.mxu0 %v445
      %662 = vmatmul.mubr.f32.gmra.mrb[0].mxu0 %v442
      %v663 = vpop.f32.mrb[0].mxu0
      %v664 = vadd.f32 %v580, %v663
      %v665 = vpop.f32.mrb[0].mxu0
      %v666 = vadd.f32 %v584, %v665
      %667 = vdwg.mxu0
      %668 = vmatprep.subr.mxu0 %v450
      %669 = vmatpush1.msra.mxu0 %v449
      %670 = vmatprep.subr.mxu0 %v454
      %671 = vmatpush1.msra.mxu0 %v453
      %672 = vmatprep.subr.mxu0 %v458
      %673 = vmatpush1.msra.mxu0 %v457
      %674 = vmatprep.subr.mxu0 %v462
      %675 = vmatpush1.msra.mxu0 %v461
      %676 = vmatprep.subr.mxu0 %v466
      %677 = vmatpush1.msra.mxu0 %v465
      %678 = vmatprep.subr.mxu0 %v470
      %679 = vmatpush1.msra.mxu0 %v469
      %680 = vmatprep.subr.mxu0 %v474
      %681 = vmatpush1.msra.mxu0 %v473
      %682 = vmatprep.subr.mxu0 %v478
      %683 = vmatpush1.msra.mxu0 %v477
      %684 = vmatprep.subr.mxu0 %v482
      %685 = vmatpush1.msra.mxu0 %v481
      %686 = vmatprep.subr.mxu0 %v486
      %687 = vmatpush1.msra.mxu0 %v485
      %688 = vmatprep.subr.mxu0 %v490
      %689 = vmatpush1.msra.mxu0 %v489
      %690 = vmatprep.subr.mxu0 %v494
      %691 = vmatpush1.msra.mxu0 %v493
      %692 = vmatprep.subr.mxu0 %v498
      %693 = vmatpush1.msra.mxu0 %v497
      %694 = vmatprep.subr.mxu0 %v502
      %695 = vmatpush1.msra.mxu0 %v501
      %696 = vmatprep.subr.mxu0 %v506
      %697 = vmatpush1.msra.mxu0 %v505
      %698 = vmatprep.subr.mxu0 %v510
      %699 = vmatpush1.msra.mxu0 %v509
      %700 = vmatprep.subr.mxu0 %v514
      %701 = vmatpush1.msra.mxu0 %v513
      %702 = vmatprep.subr.mxu0 %v518
      %703 = vmatpush1.msra.mxu0 %v517
      %704 = vmatprep.subr.mxu0 %v522
      %705 = vmatpush1.msra.mxu0 %v521
      %706 = vmatprep.subr.mxu0 %v526
      %707 = vmatpush1.msra.mxu0 %v525
      %708 = vmatprep.subr.mxu0 %v530
      %709 = vmatpush1.msra.mxu0 %v529
      %710 = vmatprep.subr.mxu0 %v534
      %711 = vmatpush1.msra.mxu0 %v533
      %712 = vmatprep.subr.mxu0 %v538
      %713 = vmatpush1.msra.mxu0 %v537
      %714 = vmatprep.subr.mxu0 %v542
      %715 = vmatpush1.msra.mxu0 %v541
      %716 = vmatprep.subr.mxu0 %v546
      %717 = vmatpush1.msra.mxu0 %v545
      %718 = vmatprep.subr.mxu0 %v550
      %719 = vmatpush1.msra.mxu0 %v549
      %720 = vmatprep.subr.mxu0 %v554
      %721 = vmatpush1.msra.mxu0 %v553
      %722 = vmatprep.subr.mxu0 %v558
      %723 = vmatpush1.msra.mxu0 %v557
      %724 = vmatprep.subr.mxu0 %v562
      %725 = vmatpush1.msra.mxu0 %v561
      %726 = vmatprep.subr.mxu0 %v566
      %727 = vmatpush1.msra.mxu0 %v565
      %728 = vmatprep.subr.mxu0 %v570
      %729 = vmatpush1.msra.mxu0 %v569
      %730 = vmatprep.subr.mxu0 %v574
      %731 = vmatpush1.msra.mxu0 %v573
      %732 = vmatprep.mubr.f32.mxu0 %v445
      %733 = vmatmul.mubr.f32.gmra.mrb[0].mxu0 %v442
      %v734 = vpop.f32.mrb[0].mxu0
      %v735 = vadd.f32 %v588, %v734
      %v736 = vpop.f32.mrb[0].mxu0
      %v737 = vadd.f32 %v592, %v736
      %738 = vdwg.mxu0
      %v739 = vxor.u32 %v664, 2147483648
      %v740 = vmul.f32 %v739, 1.442695
      %v741 = vpow.pop %v740
      %v742 = vadd.f32 %v741, 1.0
      %v743 = vrcp.pop %v742
      %v744 = vmul.f32 1.0, %v743
      %v745 = vxor.u32 %v666, 2147483648
      %v746 = vmul.f32 %v745, 1.442695
      %v747 = vpow.pop %v746
      %v748 = vadd.f32 %v747, 1.0
      %v749 = vrcp.pop %v748
      %v750 = vmul.f32 1.0, %v749
      %v751 = vtanh.pop %v735
      %v752 = vxor.u32 %v737, 2147483648
      %v753 = vmul.f32 %v752, 1.442695
      %v754 = vpow.pop %v753
      %v755 = vadd.f32 %v754, 1.0
      %v756 = vrcp.pop %v755
      %v757 = vmul.f32 1.0, %v756
      %v758 = vmul.f32 %v750, %v446
      %v759 = vmul.f32 %v744, %v751
      %v760 = vadd.f32 %v758, %v759
      %v761 = vtanh.pop %v760
      %v762 = vmul.f32 %v757, %v761
      %763 = vst [vmem:[#allocation2] sm:$0xff] %v762
      %764 = vst [vmem:[#allocation3] sm:$0xff] %v760
      %s765 = scalar_lea.vmem [#allocation2], 8
      %v766 = vld [vmem:[%s765] sm:$0xff]
      %s767 = scalar_lea.vmem [#allocation3], 8
      %v768 = vld [vmem:[%s767] sm:$0xff]
      %s769 = scalar_lea.vmem %s4, 1024
      %v770 = vld [vmem:[%s769] sm:$0xff]
      %v771 = vld [vmem:[%s769 + $0x8] sm:$0xff]
      %v772 = vld [vmem:[%s769 + $0x10] sm:$0xff]
      %v773 = vld [vmem:[%s769 + $0x18] sm:$0xff]
      %v774 = vld [vmem:[%s769 + $0x20] sm:$0xff]
      %v775 = vld [vmem:[%s769 + $0x28] sm:$0xff]
      %v776 = vld [vmem:[%s769 + $0x30] sm:$0xff]
      %v777 = vld [vmem:[%s769 + $0x38] sm:$0xff]
      %v778 = vld [vmem:[%s769 + $0x40] sm:$0xff]
      %v779 = vld [vmem:[%s769 + $0x48] sm:$0xff]
      %v780 = vld [vmem:[%s769 + $0x50] sm:$0xff]
      %v781 = vld [vmem:[%s769 + $0x58] sm:$0xff]
      %v782 = vld [vmem:[%s769 + $0x60] sm:$0xff]
      %v783 = vld [vmem:[%s769 + $0x68] sm:$0xff]
      %v784 = vld [vmem:[%s769 + $0x70] sm:$0xff]
      %v785 = vld [vmem:[%s769 + $0x78] sm:$0xff]
      %v786 = vld [vmem:[%s769 + $0x80] sm:$0xff]
      %v787 = vld [vmem:[%s769 + $0x88] sm:$0xff]
      %v788 = vld [vmem:[%s769 + $0x90] sm:$0xff]
      %v789 = vld [vmem:[%s769 + $0x98] sm:$0xff]
      %v790 = vld [vmem:[%s769 + $0xa0] sm:$0xff]
      %v791 = vld [vmem:[%s769 + $0xa8] sm:$0xff]
      %v792 = vld [vmem:[%s769 + $0xb0] sm:$0xff]
      %v793 = vld [vmem:[%s769 + $0xb8] sm:$0xff]
      %v794 = vld [vmem:[%s769 + $0xc0] sm:$0xff]
      %v795 = vld [vmem:[%s769 + $0xc8] sm:$0xff]
      %v796 = vld [vmem:[%s769 + $0xd0] sm:$0xff]
      %v797 = vld [vmem:[%s769 + $0xd8] sm:$0xff]
      %v798 = vld [vmem:[%s769 + $0xe0] sm:$0xff]
      %v799 = vld [vmem:[%s769 + $0xe8] sm:$0xff]
      %v800 = vld [vmem:[%s769 + $0xf0] sm:$0xff]
      %v801 = vld [vmem:[%s769 + $0xf8] sm:$0xff]
      %v802 = vld [vmem:[%s769 + $0x100] sm:$0xff]
      %v803 = vld [vmem:[%s769 + $0x108] sm:$0xff]
      %v804 = vld [vmem:[%s769 + $0x110] sm:$0xff]
      %v805 = vld [vmem:[%s769 + $0x118] sm:$0xff]
      %v806 = vld [vmem:[%s769 + $0x120] sm:$0xff]
      %v807 = vld [vmem:[%s769 + $0x128] sm:$0xff]
      %v808 = vld [vmem:[%s769 + $0x130] sm:$0xff]
      %v809 = vld [vmem:[%s769 + $0x138] sm:$0xff]
      %v810 = vld [vmem:[%s769 + $0x140] sm:$0xff]
      %v811 = vld [vmem:[%s769 + $0x148] sm:$0xff]
      %v812 = vld [vmem:[%s769 + $0x150] sm:$0xff]
      %v813 = vld [vmem:[%s769 + $0x158] sm:$0xff]
      %v814 = vld [vmem:[%s769 + $0x160] sm:$0xff]
      %v815 = vld [vmem:[%s769 + $0x168] sm:$0xff]
      %v816 = vld [vmem:[%s769 + $0x170] sm:$0xff]
      %v817 = vld [vmem:[%s769 + $0x178] sm:$0xff]
      %v818 = vld [vmem:[%s769 + $0x180] sm:$0xff]
      %v819 = vld [vmem:[%s769 + $0x188] sm:$0xff]
      %v820 = vld [vmem:[%s769 + $0x190] sm:$0xff]
      %v821 = vld [vmem:[%s769 + $0x198] sm:$0xff]
      %v822 = vld [vmem:[%s769 + $0x1a0] sm:$0xff]
      %v823 = vld [vmem:[%s769 + $0x1a8] sm:$0xff]
      %v824 = vld [vmem:[%s769 + $0x1b0] sm:$0xff]
      %v825 = vld [vmem:[%s769 + $0x1b8] sm:$0xff]
      %v826 = vld [vmem:[%s769 + $0x1c0] sm:$0xff]
      %v827 = vld [vmem:[%s769 + $0x1c8] sm:$0xff]
      %v828 = vld [vmem:[%s769 + $0x1d0] sm:$0xff]
      %v829 = vld [vmem:[%s769 + $0x1d8] sm:$0xff]
      %v830 = vld [vmem:[%s769 + $0x1e0] sm:$0xff]
      %v831 = vld [vmem:[%s769 + $0x1e8] sm:$0xff]
      %v832 = vld [vmem:[%s769 + $0x1f0] sm:$0xff]
      %v833 = vld [vmem:[%s769 + $0x1f8] sm:$0xff]
      %v834 = vld [vmem:[%s769 + $0x200] sm:$0xff]
      %v835 = vld [vmem:[%s769 + $0x208] sm:$0xff]
      %v836 = vld [vmem:[%s769 + $0x210] sm:$0xff]
      %v837 = vld [vmem:[%s769 + $0x218] sm:$0xff]
      %v838 = vld [vmem:[%s769 + $0x220] sm:$0xff]
      %v839 = vld [vmem:[%s769 + $0x228] sm:$0xff]
      %v840 = vld [vmem:[%s769 + $0x230] sm:$0xff]
      %v841 = vld [vmem:[%s769 + $0x238] sm:$0xff]
      %v842 = vld [vmem:[%s769 + $0x240] sm:$0xff]
      %v843 = vld [vmem:[%s769 + $0x248] sm:$0xff]
      %v844 = vld [vmem:[%s769 + $0x250] sm:$0xff]
      %v845 = vld [vmem:[%s769 + $0x258] sm:$0xff]
      %v846 = vld [vmem:[%s769 + $0x260] sm:$0xff]
      %v847 = vld [vmem:[%s769 + $0x268] sm:$0xff]
      %v848 = vld [vmem:[%s769 + $0x270] sm:$0xff]
      %v849 = vld [vmem:[%s769 + $0x278] sm:$0xff]
      %v850 = vld [vmem:[%s769 + $0x280] sm:$0xff]
      %v851 = vld [vmem:[%s769 + $0x288] sm:$0xff]
      %v852 = vld [vmem:[%s769 + $0x290] sm:$0xff]
      %v853 = vld [vmem:[%s769 + $0x298] sm:$0xff]
      %v854 = vld [vmem:[%s769 + $0x2a0] sm:$0xff]
      %v855 = vld [vmem:[%s769 + $0x2a8] sm:$0xff]
      %v856 = vld [vmem:[%s769 + $0x2b0] sm:$0xff]
      %v857 = vld [vmem:[%s769 + $0x2b8] sm:$0xff]
      %v858 = vld [vmem:[%s769 + $0x2c0] sm:$0xff]
      %v859 = vld [vmem:[%s769 + $0x2c8] sm:$0xff]
      %v860 = vld [vmem:[%s769 + $0x2d0] sm:$0xff]
      %v861 = vld [vmem:[%s769 + $0x2d8] sm:$0xff]
      %v862 = vld [vmem:[%s769 + $0x2e0] sm:$0xff]
      %v863 = vld [vmem:[%s769 + $0x2e8] sm:$0xff]
      %v864 = vld [vmem:[%s769 + $0x2f0] sm:$0xff]
      %v865 = vld [vmem:[%s769 + $0x2f8] sm:$0xff]
      %v866 = vld [vmem:[%s769 + $0x300] sm:$0xff]
      %v867 = vld [vmem:[%s769 + $0x308] sm:$0xff]
      %v868 = vld [vmem:[%s769 + $0x310] sm:$0xff]
      %v869 = vld [vmem:[%s769 + $0x318] sm:$0xff]
      %v870 = vld [vmem:[%s769 + $0x320] sm:$0xff]
      %v871 = vld [vmem:[%s769 + $0x328] sm:$0xff]
      %v872 = vld [vmem:[%s769 + $0x330] sm:$0xff]
      %v873 = vld [vmem:[%s769 + $0x338] sm:$0xff]
      %v874 = vld [vmem:[%s769 + $0x340] sm:$0xff]
      %v875 = vld [vmem:[%s769 + $0x348] sm:$0xff]
      %v876 = vld [vmem:[%s769 + $0x350] sm:$0xff]
      %v877 = vld [vmem:[%s769 + $0x358] sm:$0xff]
      %v878 = vld [vmem:[%s769 + $0x360] sm:$0xff]
      %v879 = vld [vmem:[%s769 + $0x368] sm:$0xff]
      %v880 = vld [vmem:[%s769 + $0x370] sm:$0xff]
      %v881 = vld [vmem:[%s769 + $0x378] sm:$0xff]
      %v882 = vld [vmem:[%s769 + $0x380] sm:$0xff]
      %v883 = vld [vmem:[%s769 + $0x388] sm:$0xff]
      %v884 = vld [vmem:[%s769 + $0x390] sm:$0xff]
      %v885 = vld [vmem:[%s769 + $0x398] sm:$0xff]
      %v886 = vld [vmem:[%s769 + $0x3a0] sm:$0xff]
      %v887 = vld [vmem:[%s769 + $0x3a8] sm:$0xff]
      %v888 = vld [vmem:[%s769 + $0x3b0] sm:$0xff]
      %v889 = vld [vmem:[%s769 + $0x3b8] sm:$0xff]
      %v890 = vld [vmem:[%s769 + $0x3c0] sm:$0xff]
      %v891 = vld [vmem:[%s769 + $0x3c8] sm:$0xff]
      %v892 = vld [vmem:[%s769 + $0x3d0] sm:$0xff]
      %v893 = vld [vmem:[%s769 + $0x3d8] sm:$0xff]
      %v894 = vld [vmem:[%s769 + $0x3e0] sm:$0xff]
      %v895 = vld [vmem:[%s769 + $0x3e8] sm:$0xff]
      %v896 = vld [vmem:[%s769 + $0x3f0] sm:$0xff]
      %v897 = vld [vmem:[%s769 + $0x3f8] sm:$0xff]
      %s898 = scalar_lea.vmem %s5, 4
      %v899 = vld [vmem:[%s898] sm:$0xf]
      %v901 = vlaneseq
      %v902 = vshrl.u32 %v901, 7
      %v903 = vsub.s32 0, %v902
      %v904 = vrot.slane %v899, %v903
      %v905 = vlaneseq
      %v906 = vshrl.u32 %v905, 7
      %v907 = vsub.s32 1, %v906
      %v908 = vrot.slane %v899, %v907
      %v909 = vlaneseq
      %v910 = vshrl.u32 %v909, 7
      %v911 = vsub.s32 2, %v910
      %v912 = vrot.slane %v899, %v911
      %v913 = vlaneseq
      %v914 = vshrl.u32 %v913, 7
      %v915 = vsub.s32 3, %v914
      %v916 = vrot.slane %v899, %v915
      %921 = vmatprep.subr.mxu0 %v771
      %922 = vmatpush1.msra.mxu0 %v770
      %923 = vmatprep.subr.mxu0 %v775
      %924 = vmatpush1.msra.mxu0 %v774
      %925 = vmatprep.subr.mxu0 %v779
      %926 = vmatpush1.msra.mxu0 %v778
      %927 = vmatprep.subr.mxu0 %v783
      %928 = vmatpush1.msra.mxu0 %v782
      %929 = vmatprep.subr.mxu0 %v787
      %930 = vmatpush1.msra.mxu0 %v786
      %931 = vmatprep.subr.mxu0 %v791
      %932 = vmatpush1.msra.mxu0 %v790
      %933 = vmatprep.subr.mxu0 %v795
      %934 = vmatpush1.msra.mxu0 %v794
      %935 = vmatprep.subr.mxu0 %v799
      %936 = vmatpush1.msra.mxu0 %v798
      %937 = vmatprep.subr.mxu0 %v803
      %938 = vmatpush1.msra.mxu0 %v802
      %939 = vmatprep.subr.mxu0 %v807
      %940 = vmatpush1.msra.mxu0 %v806
      %941 = vmatprep.subr.mxu0 %v811
      %942 = vmatpush1.msra.mxu0 %v810
      %943 = vmatprep.subr.mxu0 %v815
      %944 = vmatpush1.msra.mxu0 %v814
      %945 = vmatprep.subr.mxu0 %v819
      %946 = vmatpush1.msra.mxu0 %v818
      %947 = vmatprep.subr.mxu0 %v823
      %948 = vmatpush1.msra.mxu0 %v822
      %949 = vmatprep.subr.mxu0 %v827
      %950 = vmatpush1.msra.mxu0 %v826
      %951 = vmatprep.subr.mxu0 %v831
      %952 = vmatpush1.msra.mxu0 %v830
      %953 = vmatprep.subr.mxu0 %v835
      %954 = vmatpush1.msra.mxu0 %v834
      %955 = vmatprep.subr.mxu0 %v839
      %956 = vmatpush1.msra.mxu0 %v838
      %957 = vmatprep.subr.mxu0 %v843
      %958 = vmatpush1.msra.mxu0 %v842
      %959 = vmatprep.subr.mxu0 %v847
      %960 = vmatpush1.msra.mxu0 %v846
      %961 = vmatprep.subr.mxu0 %v851
      %962 = vmatpush1.msra.mxu0 %v850
      %963 = vmatprep.subr.mxu0 %v855
      %964 = vmatpush1.msra.mxu0 %v854
      %965 = vmatprep.subr.mxu0 %v859
      %966 = vmatpush1.msra.mxu0 %v858
      %967 = vmatprep.subr.mxu0 %v863
      %968 = vmatpush1.msra.mxu0 %v862
      %969 = vmatprep.subr.mxu0 %v867
      %970 = vmatpush1.msra.mxu0 %v866
      %971 = vmatprep.subr.mxu0 %v871
      %972 = vmatpush1.msra.mxu0 %v870
      %973 = vmatprep.subr.mxu0 %v875
      %974 = vmatpush1.msra.mxu0 %v874
      %975 = vmatprep.subr.mxu0 %v879
      %976 = vmatpush1.msra.mxu0 %v878
      %977 = vmatprep.subr.mxu0 %v883
      %978 = vmatpush1.msra.mxu0 %v882
      %979 = vmatprep.subr.mxu0 %v887
      %980 = vmatpush1.msra.mxu0 %v886
      %981 = vmatprep.subr.mxu0 %v891
      %982 = vmatpush1.msra.mxu0 %v890
      %983 = vmatprep.subr.mxu0 %v895
      %984 = vmatpush1.msra.mxu0 %v894
      %985 = vmatprep.mubr.f32.mxu0 %v766
      %986 = vmatmul.mubr.f32.gmra.mrb[0].mxu0 %v762
      %v987 = vpop.f32.mrb[0].mxu0
      %v988 = vadd.f32 %v904, %v987
      %v989 = vpop.f32.mrb[0].mxu0
      %v990 = vadd.f32 %v908, %v989
      %991 = vdwg.mxu0
      %992 = vmatprep.subr.mxu0 %v773
      %993 = vmatpush1.msra.mxu0 %v772
      %994 = vmatprep.subr.mxu0 %v777
      %995 = vmatpush1.msra.mxu0 %v776
      %996 = vmatprep.subr.mxu0 %v781
      %997 = vmatpush1.msra.mxu0 %v780
      %998 = vmatprep.subr.mxu0 %v785
      %999 = vmatpush1.msra.mxu0 %v784
      %1000 = vmatprep.subr.mxu0 %v789
      %1001 = vmatpush1.msra.mxu0 %v788
      %1002 = vmatprep.subr.mxu0 %v793
      %1003 = vmatpush1.msra.mxu0 %v792
      %1004 = vmatprep.subr.mxu0 %v797
      %1005 = vmatpush1.msra.mxu0 %v796
      %1006 = vmatprep.subr.mxu0 %v801
      %1007 = vmatpush1.msra.mxu0 %v800
      %1008 = vmatprep.subr.mxu0 %v805
      %1009 = vmatpush1.msra.mxu0 %v804
      %1010 = vmatprep.subr.mxu0 %v809
      %1011 = vmatpush1.msra.mxu0 %v808
      %1012 = vmatprep.subr.mxu0 %v813
      %1013 = vmatpush1.msra.mxu0 %v812
      %1014 = vmatprep.subr.mxu0 %v817
      %1015 = vmatpush1.msra.mxu0 %v816
      %1016 = vmatprep.subr.mxu0 %v821
      %1017 = vmatpush1.msra.mxu0 %v820
      %1018 = vmatprep.subr.mxu0 %v825
      %1019 = vmatpush1.msra.mxu0 %v824
      %1020 = vmatprep.subr.mxu0 %v829
      %1021 = vmatpush1.msra.mxu0 %v828
      %1022 = vmatprep.subr.mxu0 %v833
      %1023 = vmatpush1.msra.mxu0 %v832
      %1024 = vmatprep.subr.mxu0 %v837
      %1025 = vmatpush1.msra.mxu0 %v836
      %1026 = vmatprep.subr.mxu0 %v841
      %1027 = vmatpush1.msra.mxu0 %v840
      %1028 = vmatprep.subr.mxu0 %v845
      %1029 = vmatpush1.msra.mxu0 %v844
      %1030 = vmatprep.subr.mxu0 %v849
      %1031 = vmatpush1.msra.mxu0 %v848
      %1032 = vmatprep.subr.mxu0 %v853
      %1033 = vmatpush1.msra.mxu0 %v852
      %1034 = vmatprep.subr.mxu0 %v857
      %1035 = vmatpush1.msra.mxu0 %v856
      %1036 = vmatprep.subr.mxu0 %v861
      %1037 = vmatpush1.msra.mxu0 %v860
      %1038 = vmatprep.subr.mxu0 %v865
      %1039 = vmatpush1.msra.mxu0 %v864
      %1040 = vmatprep.subr.mxu0 %v869
      %1041 = vmatpush1.msra.mxu0 %v868
      %1042 = vmatprep.subr.mxu0 %v873
      %1043 = vmatpush1.msra.mxu0 %v872
      %1044 = vmatprep.subr.mxu0 %v877
      %1045 = vmatpush1.msra.mxu0 %v876
      %1046 = vmatprep.subr.mxu0 %v881
      %1047 = vmatpush1.msra.mxu0 %v880
      %1048 = vmatprep.subr.mxu0 %v885
      %1049 = vmatpush1.msra.mxu0 %v884
      %1050 = vmatprep.subr.mxu0 %v889
      %1051 = vmatpush1.msra.mxu0 %v888
      %1052 = vmatprep.subr.mxu0 %v893
      %1053 = vmatpush1.msra.mxu0 %v892
      %1054 = vmatprep.subr.mxu0 %v897
      %1055 = vmatpush1.msra.mxu0 %v896
      %1056 = vmatprep.mubr.f32.mxu0 %v766
      %1057 = vmatmul.mubr.f32.gmra.mrb[0].mxu0 %v762
      %v1058 = vpop.f32.mrb[0].mxu0
      %v1059 = vadd.f32 %v912, %v1058
      %v1060 = vpop.f32.mrb[0].mxu0
      %v1061 = vadd.f32 %v916, %v1060
      %1062 = vdwg.mxu0
      %v1063 = vxor.u32 %v988, 2147483648
      %v1064 = vmul.f32 %v1063, 1.442695
      %v1065 = vpow.pop %v1064
      %v1066 = vadd.f32 %v1065, 1.0
      %v1067 = vrcp.pop %v1066
      %v1068 = vmul.f32 1.0, %v1067
      %v1069 = vxor.u32 %v990, 2147483648
      %v1070 = vmul.f32 %v1069, 1.442695
      %v1071 = vpow.pop %v1070
      %v1072 = vadd.f32 %v1071, 1.0
      %v1073 = vrcp.pop %v1072
      %v1074 = vmul.f32 1.0, %v1073
      %v1075 = vtanh.pop %v1059
      %v1076 = vxor.u32 %v1061, 2147483648
      %v1077 = vmul.f32 %v1076, 1.442695
      %v1078 = vpow.pop %v1077
      %v1079 = vadd.f32 %v1078, 1.0
      %v1080 = vrcp.pop %v1079
      %v1081 = vmul.f32 1.0, %v1080
      %v1082 = vmul.f32 %v1074, %v768
      %v1083 = vmul.f32 %v1068, %v1075
      %v1084 = vadd.f32 %v1082, %v1083
      %v1085 = vtanh.pop %v1084
      %v1086 = vmul.f32 %v1081, %v1085
      %1087 = vst [vmem:[%s765] sm:$0xff] %v1086
      %1088 = vst [vmem:[%s767] sm:$0xff] %v1084
      %v1089 = vld [vmem:[%s6] sm:$0xff]
      %v1090 = vld [vmem:[%s6 + $0x8] sm:$0xff]
      %v1091 = vld [vmem:[%s6 + $0x10] sm:$0xff]
      %v1092 = vld [vmem:[%s6 + $0x18] sm:$0xff]
      %v1093 = vld [vmem:[%s6 + $0x20] sm:$0xff]
      %v1094 = vld [vmem:[%s6 + $0x28] sm:$0xff]
      %v1095 = vld [vmem:[%s6 + $0x30] sm:$0xff]
      %v1096 = vld [vmem:[%s6 + $0x38] sm:$0xff]
      %v1097 = vld [vmem:[%s6 + $0x40] sm:$0xff]
      %v1098 = vld [vmem:[%s6 + $0x48] sm:$0xff]
      %v1099 = vld [vmem:[%s6 + $0x50] sm:$0xff]
      %v1100 = vld [vmem:[%s6 + $0x58] sm:$0xff]
      %v1101 = vld [vmem:[%s6 + $0x60] sm:$0xff]
      %v1102 = vld [vmem:[%s6 + $0x68] sm:$0xff]
      %v1103 = vld [vmem:[%s6 + $0x70] sm:$0xff]
      %v1104 = vld [vmem:[%s6 + $0x78] sm:$0xff]
      %v1105 = vld [vmem:[%s7] sm:$0x1]
      %v1107 = vlaneseq
      %v1108 = vshrl.u32 %v1107, 7
      %v1109 = vsub.s32 0, %v1108
      %v1110 = vrot.slane %v1105, %v1109
      %1112 = vmatprep.subr.mxu0 0.0
      %1113 = vmatpush1.msra.mxu0 %v1089
      %1114 = vmatprep.subr.mxu0 0.0
      %1115 = vmatpush1.msra.mxu0 %v1090
      %1116 = vmatprep.subr.mxu0 0.0
      %1117 = vmatpush1.msra.mxu0 %v1091
      %1118 = vmatprep.subr.mxu0 0.0
      %1119 = vmatpush1.msra.mxu0 %v1092
      %1120 = vmatprep.subr.mxu0 0.0
      %1121 = vmatpush1.msra.mxu0 %v1093
      %1122 = vmatprep.subr.mxu0 0.0
      %1123 = vmatpush1.msra.mxu0 %v1094
      %1124 = vmatprep.subr.mxu0 0.0
      %1125 = vmatpush1.msra.mxu0 %v1095
      %1126 = vmatprep.subr.mxu0 0.0
      %1127 = vmatpush1.msra.mxu0 %v1096
      %1128 = vmatprep.subr.mxu0 0.0
      %1129 = vmatpush1.msra.mxu0 %v1097
      %1130 = vmatprep.subr.mxu0 0.0
      %1131 = vmatpush1.msra.mxu0 %v1098
      %1132 = vmatprep.subr.mxu0 0.0
      %1133 = vmatpush1.msra.mxu0 %v1099
      %1134 = vmatprep.subr.mxu0 0.0
      %1135 = vmatpush1.msra.mxu0 %v1100
      %1136 = vmatprep.subr.mxu0 0.0
      %1137 = vmatpush1.msra.mxu0 %v1101
      %1138 = vmatprep.subr.mxu0 0.0
      %1139 = vmatpush1.msra.mxu0 %v1102
      %1140 = vmatprep.subr.mxu0 0.0
      %1141 = vmatpush1.msra.mxu0 %v1103
      %1142 = vmatprep.subr.mxu0 0.0
      %1143 = vmatpush1.msra.mxu0 %v1104
      %1144 = vmatprep.subr.mxu0 0.0
      %1145 = vmatpush1.msra.mxu0 0.0
      %1146 = vmatprep.subr.mxu0 0.0
      %1147 = vmatpush1.msra.mxu0 0.0
      %1148 = vmatprep.subr.mxu0 0.0
      %1149 = vmatpush1.msra.mxu0 0.0
      %1150 = vmatprep.subr.mxu0 0.0
      %1151 = vmatpush1.msra.mxu0 0.0
      %1152 = vmatprep.subr.mxu0 0.0
      %1153 = vmatpush1.msra.mxu0 0.0
      %1154 = vmatprep.subr.mxu0 0.0
      %1155 = vmatpush1.msra.mxu0 0.0
      %1156 = vmatprep.subr.mxu0 0.0
      %1157 = vmatpush1.msra.mxu0 0.0
      %1158 = vmatprep.subr.mxu0 0.0
      %1159 = vmatpush1.msra.mxu0 0.0
      %1160 = vmatprep.subr.mxu0 0.0
      %1161 = vmatpush1.msra.mxu0 0.0
      %1162 = vmatprep.subr.mxu0 0.0
      %1163 = vmatpush1.msra.mxu0 0.0
      %1164 = vmatprep.subr.mxu0 0.0
      %1165 = vmatpush1.msra.mxu0 0.0
      %1166 = vmatprep.subr.mxu0 0.0
      %1167 = vmatpush1.msra.mxu0 0.0
      %1168 = vmatprep.subr.mxu0 0.0
      %1169 = vmatpush1.msra.mxu0 0.0
      %1170 = vmatprep.subr.mxu0 0.0
      %1171 = vmatpush1.msra.mxu0 0.0
      %1172 = vmatprep.subr.mxu0 0.0
      %1173 = vmatpush1.msra.mxu0 0.0
      %1174 = vmatprep.subr.mxu0 0.0
      %1175 = vmatpush1.msra.mxu0 0.0
      %1176 = vmatprep.mubr.f32.mxu0 0.0
      %1177 = vmatmul.mubr.f32.gmra.mrb[0].mxu0 %v1086
      %v1178 = vpop.f32.mrb[0].mxu0
      %v1179 = vadd.f32 %v1110, %v1178
      %v1180 = vpop.f32.mrb[0].mxu0
      %1181 = vdwg.mxu0
      %1182 = vst [vmem:[%s334] sm:$0xff] %v1179
      %vm1183 = vcmp.lt.s32.totalorder %v352, 32
      %v1184 = vsel %vm1183, %v1179, -inf
      %1185 = vmax.xlane.f32.xlu0 %v1184
      %v1186 = vpop.xlane.xlu0 %1185
      %vm1187 = vcmp.eq.f32.partialorder %v1184, %v1186
      %v1188 = vcvt.s32.f32 %v352
      %v1189 = vsel %vm1187, %v1188, 128.0
      %1190 = vmin.xlane.f32.xlu0 %v1189
      %v1191 = vpop.xlane.xlu0 %1190
      %v1192 = vcvt.f32.s32.to.zero.pseudo %v1191
      %s1193 = sld [smem:[#allocation6 + %s27]]
      %v1194 = vld [vmem:[%s330] sm:$0xff]
      %v1195 = vstv %s1193
      %v1196 = vmul.u32 %v1195, %v1194
      %s1197 = ssub.s32 1, %s1193
      %v1198 = vstv %s1197
      %v1199 = vmul.u32 %v1198, %v1192
      %v1200 = vadd.s32 %v1196, %v1199
      %vm1201 = vcmask 7168
      %1202 = vst.msk [vmem:[#allocation4] sm:$0xff] %vm1201, %v1200
      %p1203 = scmp.lt.s32.totalorder %s27, 6
      %s1204 = scalar_select %p1203, %s27, 6
      %s1205 = smul.addr %s1204, 8
      %s1206 = scalar_lea.vmem %s10, %s1205
      // Predicated region
      $region61: #{forward.3} parent=55 // pred_check
        %p1207 = pneg %p239
      $region62: #{forward.3} parent=55 // pred_check_branch
        %1209 = sbr.rel (%p1207) target = $region64
      $region63: #{forward.3} parent=55 // pred_region
        _
      $region64: #{forward.3} parent=55 // pred_fallthru
        _
    $region56: #{forward.3} parent=5 // pred_fallthru
      _
    %p1210 = scmp.le.s32.totalorder 2, %s22
    // Predicated region
    $region65: #{forward.3} parent=5 // pred_check
      %p1211 = pneg %p1210
    $region66: #{forward.3} parent=5 // pred_check_branch
      %1213 = sbr.rel (%p1211) target = $region68
    $region67: #{forward.3} parent=5 // pred_region
      %s1214 = ssub.s32 %s22, 2
      // Predicated region
      $region69: #{forward.3} parent=67 // pred_check
        %p1215 = pneg %p245
      $region70: #{forward.3} parent=67 // pred_check_branch
        %1217 = sbr.rel (%p1215) target = $region72
      $region71: #{forward.3} parent=67 // pred_region
        %p1218 = scmp.lt.s32.totalorder %s28, 6
        %s1219 = scalar_select %p1218, %s28, 6
        %s1220 = smul.addr %s1219, 8
        %s1221 = scalar_lea.vmem %s10, %s1220
      $region72: #{forward.3} parent=67 // pred_fallthru
        _
    $region68: #{forward.3} parent=5 // pred_fallthru
      _
  $region6: #{forward.3} parent=0 // loop_footer
    %s26 = sadd.s32 1, %s22
  $region7: #{forward.3} parent=0 // loop_footer_branch
    %21 = sbr.rel target = $region3
  $region8: #{forward.3} parent=0 // loop_exit
    _

</llo_original>
